<compile_context>
chip_gen: v7x
topology: tpu7x:2x2x1
jax: 0.10.0
libtpu: 0.0.40
codegen_flags: <defaults>
</compile_context>

<pallas_src>
import functools

import jax
import jax.numpy as jnp
import numpy as np
from jax.experimental import pallas as pl
from jax.experimental.pallas import tpu as pltpu

NEG_INIT = -1e30   # finite "-inf": identity element for the masked max only
SEG_LANES = 128    # segment axis padded to one vreg lane width

# Temp-aware VMEM budget: 2x double-buffered (input + lp output) blocks plus
# ~10 full (tile_b, D) in-kernel temporaries (x, seg_id, masks, m_lane, ex,
# exx, logz_lane, invz_lane, where temps) ~= 14 * 4 * D bytes per row.  16 MiB
# fits v5e's 16 MiB default scoped limit; the explicit 32 MiB cap below adds
# headroom and stays far under v7x's 64 MiB physical VMEM.
_VMEM_BUDGET_BYTES = 16 * 1024 * 1024
_VMEM_LIMIT_BYTES = 32 * 1024 * 1024


def _round_up(n, m):
    return ((n + m - 1) // m) * m


def _multi_softmax_kernel(x_ref, memb_ref, membt_ref, lp_ref, ent_ref, *,
                          offsets):
    """Segment-wise log-softmax + fused entropy over one row tile.

    x_ref     : (TILE_B, D)     f32 flat logits (no lane padding)
    memb_ref  : (D, SEG_PAD)    f32 static one-hot segment membership
    membt_ref : (SEG_PAD, D)    f32 its transpose (MXU scatter-back)
    lp_ref    : (TILE_B, D)     f32 per-segment-normalized log-probabilities
    ent_ref   : (TILE_B, 1)     f32 entropy summed over all segments
    offsets   : static tuple of segment start lanes
    """
    x = x_ref[...]
    memb = memb_ref[...]
    membt = membt_ref[...]
    tb, d = x.shape
    seg_pad = memb.shape[1]
    n_seg = len(offsets)
    hi = jax.lax.Precision.HIGHEST

    # Single int32 segment-id lane map -> each mask is ONE compare, built once.
    lane = jax.lax.broadcasted_iota(jnp.int32, (tb, d), 1)
    seg_id = jnp.zeros((tb, d), jnp.int32)
    for off in offsets[1:]:
        seg_id = seg_id + (lane >= off).astype(jnp.int32)

    # Per-segment max (XLU reduce) scattered back onto that segment's lanes.
    neg = jnp.float32(NEG_INIT)
    m_lane = jnp.zeros_like(x)
    m_sum = jnp.zeros((tb, 1), jnp.float32)
    for s in range(n_seg):
        msk = seg_id == s
        m_s = jnp.max(jnp.where(msk, x, neg), axis=-1, keepdims=True)
        m_lane = jnp.where(msk, m_s, m_lane)
        m_sum = m_sum + m_s

    # One exp per element; entropy numerator fused as ex * x (no probs tensor).
    ex = jnp.exp(x - m_lane)
    exx = ex * x

    # Segment sums + scatter-backs on the MXU.  The one-hot operand is exactly
    # representable, and HIGHEST precision keeps the f32 operand exact, so
    # these matmuls are bit-tight f32 segment reductions / selections.
    z_seg = jnp.dot(ex, memb, precision=hi, preferred_element_type=jnp.float32)
    seg_lane = jax.lax.broadcasted_iota(jnp.int32, (tb, seg_pad), 1)
    z_guard = jnp.where(seg_lane >= n_seg, 1.0, z_seg)  # log/div-safe padding
    logz_nom = jnp.log(z_guard)                         # padded lanes -> 0
    invz = 1.0 / z_guard                                # padded lanes -> 1

    logz_nom_lane = jnp.dot(logz_nom, membt, precision=hi,
                            preferred_element_type=jnp.float32)
    invz_lane = jnp.dot(invz, membt, precision=hi,
                        preferred_element_type=jnp.float32)

    lp_ref[...] = x - logz_nom_lane - m_lane
    # H = sum_s logZ_s - sum_d p_d * x_d ; padded segment lanes add exactly 0.
    ent_ref[...] = (jnp.sum(logz_nom, axis=-1, keepdims=True) + m_sum
                    - jnp.sum(exx * invz_lane, axis=-1, keepdims=True))


@functools.partial(jax.jit, static_argnames=("offsets", "tile_b"))
def _segmented_log_softmax(x, memb, membt, *, offsets, tile_b):
    rows, d = x.shape
    seg_pad = memb.shape[1]
    n_seg = len(offsets)
    kernel = functools.partial(_multi_softmax_kernel, offsets=offsets)
    cost = pl.CostEstimate(
        flops=int(6 * rows * d * seg_pad + rows * d * (2 * n_seg + 8)),
        transcendentals=int(rows * d + rows * seg_pad),
        bytes_accessed=int(2 * rows * d * 4 + 2 * d * seg_pad * 4 + rows * 4),
    )
    return pl.pallas_call(
        kernel,
        out_shape=(
            jax.ShapeDtypeStruct((rows, d), jnp.float32),
            jax.ShapeDtypeStruct((rows, 1), jnp.float32),
        ),
        grid=(pl.cdiv(rows, tile_b),),
        in_specs=[
            pl.BlockSpec((tile_b, d), lambda i: (i, 0)),
            pl.BlockSpec((d, seg_pad), lambda i: (0, 0)),   # constant block
            pl.BlockSpec((seg_pad, d), lambda i: (0, 0)),   # constant block
        ],
        out_specs=(
            pl.BlockSpec((tile_b, d), lambda i: (i, 0)),
            pl.BlockSpec((tile_b, 1), lambda i: (i, 0)),
        ),
        compiler_params=pltpu.CompilerParams(
            dimension_semantics=("parallel",),
            vmem_limit_bytes=_VMEM_LIMIT_BYTES,
        ),
        cost_estimate=cost,
    )(x, memb, membt)


class MultiCategoricalPallas:
    """JAX/Pallas equivalent of pfrl's MultiCategorical."""

    def __init__(self, dims, logits):
        self.dims = tuple(int(d) for d in dims)
        logits = jnp.asarray(logits, jnp.float32)
        B, D = logits.shape
        assert D == sum(self.dims)
        n_seg = len(self.dims)

        offsets, off = [], 0
        for d in self.dims:
            offsets.append(off)
            off += d
        self._offsets = tuple(offsets)

        # Static one-hot segment-membership matrix (and transpose) that lets
        # the kernel run segment sums / scatter-backs on the MXU.
        seg_pad = max(SEG_LANES, _round_up(n_seg, SEG_LANES))
        seg_of_lane = np.repeat(np.arange(n_seg), np.asarray(self.dims))
        memb_np = (seg_of_lane[:, None] == np.arange(seg_pad)[None, :])
        memb = jnp.asarray(memb_np, jnp.float32)
        membt = jnp.asarray(memb_np.T, jnp.float32)

        # Row-tile sizing: temp-aware VMEM budget AND enough grid steps that
        # v7x's two TensorCores both get work and DMA overlaps with compute.
        memb_bytes = 2 * 2 * D * seg_pad * 4          # both constants, 2-deep
        avail = max(_VMEM_BUDGET_BYTES - memb_bytes, 2 * 1024 * 1024)
        bytes_per_row = 4 * D * 14                    # 4 I/O blocks + ~10 temps
        budget_rows = max(8, (avail // bytes_per_row) // 8 * 8)
        split_rows = max(8, _round_up(-(-B // 8), 8))  # target ~8 grid steps
        tile_b = int(max(8, min(1024, budget_rows, split_rows)))

        # No host-side padding or output slicing: ragged batch edge handled by
        # the cdiv grid; non-128 category axis handled by block dim == D.
        lp, ent = _segmented_log_softmax(
            logits, memb, membt, offsets=self._offsets, tile_b=tile_b)
        self._log_probs = lp           # (B, D), valid per-segment log-probs
        self._entropy = ent[:, 0]      # (B,)
        self._B = B

    def log_prob(self, actions):
        # actions: (B, n_seg) int -> sum over segments of per-segment log-probs
        actions = jnp.asarray(actions, jnp.int32)
        flat_idx = actions + jnp.asarray(self._offsets, jnp.int32)[None, :]
        lp = jnp.take_along_axis(self._log_probs, flat_idx, axis=1)
        return jnp.sum(lp, axis=1)

    def entropy(self):
        return self._entropy

    def mode(self):
        modes = []
        for off, d in zip(self._offsets, self.dims):
            modes.append(jnp.argmax(self._log_probs[:, off:off + d], axis=-1))
        return jnp.stack(modes, axis=1)

    def sample(self, key):
        # Gumbel-max sampling in plain JAX (not a kernel hot path).
        samples = []
        for off, d in zip(self._offsets, self.dims):
            key, sub = jax.random.split(key)
            g = jax.random.gumbel(sub, (self._B, d), dtype=jnp.float32)
            samples.append(
                jnp.argmax(self._log_probs[:, off:off + d] + g, axis=-1)
            )
        return jnp.stack(samples, axis=1)


class MultiSoftmaxCategoricalHead:
    def __init__(self, dims=None):
        self.dims = dims

    def __call__(self, logits):
        return MultiCategoricalPallas(dims=self.dims, logits=logits)


if __name__ == "__main__":
    def _reference(logits, dims, actions):
        segs, off = [], 0
        for d in dims:
            segs.append(jax.nn.log_softmax(logits[:, off:off + d], axis=-1))
            off += d
        lp = sum(
            jnp.take_along_axis(s, actions[:, i:i + 1], axis=-1)[:, 0]
            for i, s in enumerate(segs)
        )
        ent = sum(-jnp.sum(jnp.exp(s) * s, axis=-1) for s in segs)
        mode = jnp.stack([jnp.argmax(s, axis=-1) for s in segs], axis=1)
        return lp, ent, mode

    key = jax.random.PRNGKey(0)
    # small config matching the module, one spanning a 128-lane boundary, and
    # one with a ragged multi-step batch grid.
    for dims, B in (((3, 5, 4), 2), ((4, 2, 7, 130), 5), ((6, 10), 17)):
        key, k_logits, k_act = jax.random.split(key, 3)
        logits = jax.random.normal(k_logits, (B, sum(dims)), dtype=jnp.float32)
        actions = jnp.stack(
            [jax.random.randint(jax.random.fold_in(k_act, i), (B,), 0, d)
             for i, d in enumerate(dims)],
            axis=1,
        )

        head = MultiSoftmaxCategoricalHead(dims)
        dist = head(logits)
        lp = jax.block_until_ready(dist.log_prob(actions))
        ent = jax.block_until_ready(dist.entropy())
        mode = jax.block_until_ready(dist.mode())

        lp_ref, ent_ref, mode_ref = _reference(logits, dims, actions)
        assert lp.shape == (B,) and ent.shape == (B,)
        assert mode.shape == (B, len(dims))
        assert jnp.allclose(lp, lp_ref, atol=1e-5), (dims, lp, lp_ref)
        assert jnp.allclose(ent, ent_ref, atol=1e-4), (dims, ent, ent_ref)
        assert jnp.array_equal(mode, mode_ref), (dims, mode, mode_ref)

    # smoke-test the sampling path (plain JAX glue)
    s = jax.block_until_ready(
        MultiSoftmaxCategoricalHead((3, 5, 4))(
            jax.random.normal(jax.random.PRNGKey(1), (2, 12), jnp.float32)
        ).sample(jax.random.PRNGKey(2))
    )
    assert s.shape == (2, 3)

    print("KERNEL_OK")
</pallas_src>

<mosaic_0001>
module attributes {stable_mosaic.version = 11 : i64} {
  func.func @_multi_softmax_kernel(%arg0: i32, %arg1: memref<8x12xf32, #tpu.memory_space<vmem>>, %arg2: memref<12x128xf32, #tpu.memory_space<vmem>>, %arg3: memref<128x12xf32, #tpu.memory_space<vmem>>, %arg4: memref<8x12xf32, #tpu.memory_space<vmem>>, %arg5: memref<8x1xf32, #tpu.memory_space<vmem>>) attributes {dimension_semantics = [#tpu.dimension_semantics<parallel>], iteration_bounds = array<i64: 1>, scalar_prefetch = 0 : i64, scratch_operands = 0 : i64, tpu.core_type = #tpu.core_type<tc>, window_params = [{transform_indices = @transform_0, window_bounds = array<i64: 8, 12>}, {pipeline_mode = #tpu.pipeline_mode<synchronous>, transform_indices = @transform_1, window_bounds = array<i64: 12, 128>}, {pipeline_mode = #tpu.pipeline_mode<synchronous>, transform_indices = @transform_2, window_bounds = array<i64: 128, 12>}, {transform_indices = @transform_3, window_bounds = array<i64: 8, 12>}, {transform_indices = @transform_4, window_bounds = array<i64: 8, 1>}]} {
    %c0 = arith.constant 0 : index
    %c0_0 = arith.constant 0 : index
    %0 = vector.load %arg1[%c0, %c0_0] : memref<8x12xf32, #tpu.memory_space<vmem>>, vector<8x12xf32>
    %c0_1 = arith.constant 0 : index
    %c0_2 = arith.constant 0 : index
    %1 = vector.load %arg2[%c0_1, %c0_2] : memref<12x128xf32, #tpu.memory_space<vmem>>, vector<12x128xf32>
    %c0_3 = arith.constant 0 : index
    %c0_4 = arith.constant 0 : index
    %2 = vector.load %arg3[%c0_3, %c0_4] : memref<128x12xf32, #tpu.memory_space<vmem>>, vector<128x12xf32>
    %3 = tpu.iota {dimensions = array<i32: 1>} : vector<8x12xi32>
    %c0_i32 = arith.constant 0 : i32
    %4 = vector.broadcast %c0_i32 : i32 to vector<8x12xi32>
    %c3_i32 = arith.constant 3 : i32
    %5 = vector.broadcast %c3_i32 : i32 to vector<8x12xi32>
    %6 = arith.cmpi sge, %3, %5 : vector<8x12xi32>
    %7 = arith.extui %6 : vector<8x12xi1> to vector<8x12xi32>
    %8 = arith.addi %4, %7 : vector<8x12xi32>
    %c8_i32 = arith.constant 8 : i32
    %9 = vector.broadcast %c8_i32 : i32 to vector<8x12xi32>
    %10 = arith.cmpi sge, %3, %9 : vector<8x12xi32>
    %11 = arith.extui %10 : vector<8x12xi1> to vector<8x12xi32>
    %12 = arith.addi %8, %11 : vector<8x12xi32>
    %cst = arith.constant 0.000000e+00 : f32
    %13 = vector.broadcast %cst : f32 to vector<8x12xf32>
    %cst_5 = arith.constant 0.000000e+00 : f32
    %14 = vector.broadcast %cst_5 : f32 to vector<8x1xf32>
    %c0_i32_6 = arith.constant 0 : i32
    %15 = vector.broadcast %c0_i32_6 : i32 to vector<8x12xi32>
    %16 = arith.cmpi eq, %12, %15 : vector<8x12xi32>
    %cst_7 = arith.constant -1.000000e+30 : f32
    %17 = vector.broadcast %cst_7 : f32 to vector<8x12xf32>
    %18 = arith.select %16, %0, %17 : vector<8x12xi1>, vector<8x12xf32>
    %cst_8 = arith.constant dense<0xFF800000> : vector<8xf32>
    %19 = vector.multi_reduction <maximumf>, %18, %cst_8 [1] : vector<8x12xf32> to vector<8xf32>
    %20 = vector.shape_cast %19 : vector<8xf32> to vector<8x1xf32>
    %21 = vector.shape_cast %20 : vector<8x1xf32> to vector<8x1xf32>
    %22 = vector.broadcast %21 : vector<8x1xf32> to vector<8x12xf32>
    %23 = arith.select %16, %22, %13 : vector<8x12xi1>, vector<8x12xf32>
    %24 = arith.addf %14, %20 : vector<8x1xf32>
    %c1_i32 = arith.constant 1 : i32
    %25 = vector.broadcast %c1_i32 : i32 to vector<8x12xi32>
    %26 = arith.cmpi eq, %12, %25 : vector<8x12xi32>
    %cst_9 = arith.constant -1.000000e+30 : f32
    %27 = vector.broadcast %cst_9 : f32 to vector<8x12xf32>
    %28 = arith.select %26, %0, %27 : vector<8x12xi1>, vector<8x12xf32>
    %cst_10 = arith.constant dense<0xFF800000> : vector<8xf32>
    %29 = vector.multi_reduction <maximumf>, %28, %cst_10 [1] : vector<8x12xf32> to vector<8xf32>
    %30 = vector.shape_cast %29 : vector<8xf32> to vector<8x1xf32>
    %31 = vector.shape_cast %30 : vector<8x1xf32> to vector<8x1xf32>
    %32 = vector.broadcast %31 : vector<8x1xf32> to vector<8x12xf32>
    %33 = arith.select %26, %32, %23 : vector<8x12xi1>, vector<8x12xf32>
    %34 = arith.addf %24, %30 : vector<8x1xf32>
    %c2_i32 = arith.constant 2 : i32
    %35 = vector.broadcast %c2_i32 : i32 to vector<8x12xi32>
    %36 = arith.cmpi eq, %12, %35 : vector<8x12xi32>
    %cst_11 = arith.constant -1.000000e+30 : f32
    %37 = vector.broadcast %cst_11 : f32 to vector<8x12xf32>
    %38 = arith.select %36, %0, %37 : vector<8x12xi1>, vector<8x12xf32>
    %cst_12 = arith.constant dense<0xFF800000> : vector<8xf32>
    %39 = vector.multi_reduction <maximumf>, %38, %cst_12 [1] : vector<8x12xf32> to vector<8xf32>
    %40 = vector.shape_cast %39 : vector<8xf32> to vector<8x1xf32>
    %41 = vector.shape_cast %40 : vector<8x1xf32> to vector<8x1xf32>
    %42 = vector.broadcast %41 : vector<8x1xf32> to vector<8x12xf32>
    %43 = arith.select %36, %42, %33 : vector<8x12xi1>, vector<8x12xf32>
    %44 = arith.addf %34, %40 : vector<8x1xf32>
    %45 = arith.subf %0, %43 : vector<8x12xf32>
    %46 = math.exp %45 : vector<8x12xf32>
    %47 = arith.mulf %46, %0 : vector<8x12xf32>
    %cst_13 = arith.constant dense<0.000000e+00> : vector<8x128xf32>
    %48 = tpu.matmul %46, %1, %cst_13 {dimension_numbers = #tpu.dot_dimension_numbers<[1], [0], [0], [1], [0, 0, 1, 1], [], []>, precision = #tpu.contract_precision<fp32>} : vector<8x12xf32>, vector<12x128xf32>, vector<8x128xf32> -> vector<8x128xf32>
    %49 = tpu.iota {dimensions = array<i32: 1>} : vector<8x128xi32>
    %c3_i32_14 = arith.constant 3 : i32
    %50 = vector.broadcast %c3_i32_14 : i32 to vector<8x128xi32>
    %51 = arith.cmpi sge, %49, %50 : vector<8x128xi32>
    %cst_15 = arith.constant 1.000000e+00 : f32
    %52 = vector.broadcast %cst_15 : f32 to vector<8x128xf32>
    %53 = arith.select %51, %52, %48 : vector<8x128xi1>, vector<8x128xf32>
    %54 = math.log %53 : vector<8x128xf32>
    %cst_16 = arith.constant 1.000000e+00 : f32
    %55 = vector.broadcast %cst_16 : f32 to vector<8x128xf32>
    %56 = arith.divf %55, %53 : vector<8x128xf32>
    %cst_17 = arith.constant dense<0.000000e+00> : vector<8x12xf32>
    %57 = tpu.matmul %54, %2, %cst_17 {dimension_numbers = #tpu.dot_dimension_numbers<[1], [0], [0], [1], [0, 0, 1, 1], [], []>, precision = #tpu.contract_precision<fp32>} : vector<8x128xf32>, vector<128x12xf32>, vector<8x12xf32> -> vector<8x12xf32>
    %cst_18 = arith.constant dense<0.000000e+00> : vector<8x12xf32>
    %58 = tpu.matmul %56, %2, %cst_18 {dimension_numbers = #tpu.dot_dimension_numbers<[1], [0], [0], [1], [0, 0, 1, 1], [], []>, precision = #tpu.contract_precision<fp32>} : vector<8x128xf32>, vector<128x12xf32>, vector<8x12xf32> -> vector<8x12xf32>
    %59 = arith.subf %0, %57 : vector<8x12xf32>
    %60 = arith.subf %59, %43 : vector<8x12xf32>
    %c0_19 = arith.constant 0 : index
    %c0_20 = arith.constant 0 : index
    %61 = vector.load %arg4[%c0_19, %c0_20] : memref<8x12xf32, #tpu.memory_space<vmem>>, vector<8x12xf32>
    tpu.vector_store %arg4[%c0_19, %c0_20], %60 {strides = array<i32>} : memref<8x12xf32, #tpu.memory_space<vmem>>, vector<8x12xf32>,
    %cst_21 = arith.constant dense<0.000000e+00> : vector<8xf32>
    %62 = vector.multi_reduction <add>, %54, %cst_21 [1] : vector<8x128xf32> to vector<8xf32>
    %63 = vector.shape_cast %62 : vector<8xf32> to vector<8x1xf32>
    %64 = arith.addf %63, %44 : vector<8x1xf32>
    %65 = arith.mulf %47, %58 : vector<8x12xf32>
    %cst_22 = arith.constant dense<0.000000e+00> : vector<8xf32>
    %66 = vector.multi_reduction <add>, %65, %cst_22 [1] : vector<8x12xf32> to vector<8xf32>
    %67 = vector.shape_cast %66 : vector<8xf32> to vector<8x1xf32>
    %68 = arith.subf %64, %67 : vector<8x1xf32>
    %c0_23 = arith.constant 0 : index
    %c0_24 = arith.constant 0 : index
    %69 = vector.load %arg5[%c0_23, %c0_24] : memref<8x1xf32, #tpu.memory_space<vmem>>, vector<8x1xf32>
    tpu.vector_store %arg5[%c0_23, %c0_24], %68 {strides = array<i32>} : memref<8x1xf32, #tpu.memory_space<vmem>>, vector<8x1xf32>,
    return
  }
  func.func @transform_0(%arg0: i32) -> (i32, i32) {
    %c0_i32 = arith.constant 0 : i32
    %c0_i32_0 = arith.constant 0 : i32
    return %arg0, %c0_i32 : i32, i32
  }
  func.func @transform_1(%arg0: i32) -> (i32, i32) {
    %c0_i32 = arith.constant 0 : i32
    %c0_i32_0 = arith.constant 0 : i32
    %c0_i32_1 = arith.constant 0 : i32
    return %c0_i32, %c0_i32_0 : i32, i32
  }
  func.func @transform_2(%arg0: i32) -> (i32, i32) {
    %c0_i32 = arith.constant 0 : i32
    %c0_i32_0 = arith.constant 0 : i32
    %c0_i32_1 = arith.constant 0 : i32
    return %c0_i32, %c0_i32_0 : i32, i32
  }
  func.func @transform_3(%arg0: i32) -> (i32, i32) {
    %c0_i32 = arith.constant 0 : i32
    %c0_i32_0 = arith.constant 0 : i32
    return %arg0, %c0_i32 : i32, i32
  }
  func.func @transform_4(%arg0: i32) -> (i32, i32) {
    %c0_i32 = arith.constant 0 : i32
    %c0_i32_0 = arith.constant 0 : i32
    return %arg0, %c0_i32 : i32, i32
  }
}

</mosaic_0001>

<llo_original>
// kernel: _segmented_log_softmax.1
$region0: #{_segmented_log_softmax.1}
  #allocation0 [shape = 'u32[]', space=smem, size = 0x4, offset = 0x4, fixed_abs, tag = 'smem constant byte address 0x4 - core index']
  #allocation1 [shape = 'u32[144,128]{1,0:T(1,128)}', space=vmem, size = 0x12000, scoped, tag = 'internal scratch']
  %s0 = inlined_call_operand.vmem [shape: f32[2,12], index: 0, kind: input, shape index: {}]
  %s1 = inlined_call_operand.vmem [shape: f32[12,128], index: 1, kind: input, shape index: {}]
  %s2 = inlined_call_operand.vmem [shape: f32[128,12], index: 2, kind: input, shape index: {}]
  %s3 = inlined_call_operand.hbm [shape: f32[2,12], index: 3, kind: output, shape index: {0}]
  %s4 = inlined_call_operand.vmem [shape: f32[2,1], index: 4, kind: output, shape index: {1}]
  %5 = xla_tuple %s3, %s4
  %s6 = sld [smem:[#allocation0]]
  $region60: #{_segmented_log_softmax.1} parent=0
    _
  %s8 = ssub.s32 1, %s6
  %s9 = scalar_select 0, %s8, %s6
  $region1: #{_segmented_log_softmax.1} parent=0
    #allocation2 [shape = 'u8[4096]{0}', space=vmem, size = 0x1000, scoped, tag = 'output window, operand 0, single buffered']
    #allocation3 [shape = 's32[1]{0}', space=sflag, size = 0x4, scoped, tag = 'scoped memory for _segmented_log_softmax.1']
    #allocation4 [shape = 'u8[4096]{0}', space=vmem, size = 0x1000, scoped, tag = 'output window, operand 1, single buffered']
    %10 = vsyncpa [#allocation3], 0
    // Predicated region
    $region2: #{_segmented_log_softmax.1} parent=1 // pred_check
      _
    $region3: #{_segmented_log_softmax.1} parent=1 // pred_check_branch
      %12 = sbr.rel (0) target = $region5
    $region4: #{_segmented_log_softmax.1} parent=1 // pred_region
      _
    $region5: #{_segmented_log_softmax.1} parent=1 // pred_fallthru
      _
    // Predicated region
    $region6: #{_segmented_log_softmax.1} parent=1 // pred_check
      _
    $region7: #{_segmented_log_softmax.1} parent=1 // pred_check_branch
      %14 = sbr.rel (0) target = $region9
    $region8: #{_segmented_log_softmax.1} parent=1 // pred_region
      _
    $region9: #{_segmented_log_softmax.1} parent=1 // pred_fallthru
      _
    // Predicated region
    $region10: #{_segmented_log_softmax.1} parent=1 // pred_check
      _
    $region11: #{_segmented_log_softmax.1} parent=1 // pred_check_branch
      %16 = sbr.rel (0) target = $region13
    $region12: #{_segmented_log_softmax.1} parent=1 // pred_region
      _
    $region13: #{_segmented_log_softmax.1} parent=1 // pred_fallthru
      _
    %v17 = vld [vmem:[%s0] sm:$0xff]
    %v18 = vld [vmem:[%s1] sm:$0xff]
    %v19 = vld [vmem:[%s1 + $0x8] sm:$0xf]
    %v20 = vld [vmem:[%s2] sm:$0xff]
    %v21 = vld [vmem:[%s2 + $0x8] sm:$0xff]
    %v22 = vld [vmem:[%s2 + $0x10] sm:$0xff]
    %v23 = vld [vmem:[%s2 + $0x18] sm:$0xff]
    %v24 = vld [vmem:[%s2 + $0x20] sm:$0xff]
    %v25 = vld [vmem:[%s2 + $0x28] sm:$0xff]
    %v26 = vld [vmem:[%s2 + $0x30] sm:$0xff]
    %v27 = vld [vmem:[%s2 + $0x38] sm:$0xff]
    %v28 = vld [vmem:[%s2 + $0x40] sm:$0xff]
    %v29 = vld [vmem:[%s2 + $0x48] sm:$0xff]
    %v30 = vld [vmem:[%s2 + $0x50] sm:$0xff]
    %v31 = vld [vmem:[%s2 + $0x58] sm:$0xff]
    %v32 = vld [vmem:[%s2 + $0x60] sm:$0xff]
    %v33 = vld [vmem:[%s2 + $0x68] sm:$0xff]
    %v34 = vld [vmem:[%s2 + $0x70] sm:$0xff]
    %v35 = vld [vmem:[%s2 + $0x78] sm:$0xff]
    %v36 = vlaneseq
    %v37 = vand.u32 %v36, 127
    %vm38 = vcmp.ge.s32.totalorder %v37, 3
    %v39 = vsel %vm38, 1, 0
    %vm40 = vcmp.ge.s32.totalorder %v37, 8
    %v41 = vsel %vm40, 1, 0
    %v42 = vadd.s32 %v39, %v41
    %vm43 = vcmp.eq.s32.totalorder %v42, 0
    %v44 = vsel %vm43, %v17, -1e+30
    %vm45 = vcmask 97280
    %v46 = vsel %vm45, %v44, -inf
    %47 = vmax.xlane.f32.xlu0 %v46
    %v48 = vpop.xlane.xlu0 %47
    %v49 = vsel %vm43, %v48, 0.0
    %v50 = vadd.f32 %v48, 0.0
    %vm51 = vcmp.eq.s32.totalorder %v42, 1
    %v52 = vsel %vm51, %v17, -1e+30
    %v53 = vsel %vm45, %v52, -inf
    %54 = vmax.xlane.f32.xlu0 %v53
    %v55 = vpop.xlane.xlu0 %54
    %v56 = vsel %vm51, %v55, %v49
    %v57 = vadd.f32 %v50, %v55
    %vm58 = vcmp.eq.s32.totalorder %v42, 2
    %v59 = vsel %vm58, %v17, -1e+30
    %v60 = vsel %vm45, %v59, -inf
    %61 = vmax.xlane.f32.xlu0 %v60
    %v62 = vpop.xlane.xlu0 %61
    %v63 = vsel %vm58, %v62, %v56
    %v64 = vadd.f32 %v57, %v62
    %v65 = vsub.f32 %v17, %v63
    %v66 = vmul.f32 %v65, 1.442695
    %v67 = vpow.pop %v66
    %v68 = vmul.f32 %v67, %v17
    %v70 = vsel %vm45, %v67, 0
    %vm72 = vcmask 1043456
    %v74 = vsel %vm72, %v19, 0
    %76 = vmatprep.subr.mxu0 0.0
    %v77 = vand.u32 %v18, 4294901760
    %78 = vmatpush1.msra.mxu0 %v77
    %79 = vmatprep.subr.mxu0 0.0
    %v80 = vand.u32 %v74, 4294901760
    %81 = vmatpush1.msra.mxu0 %v80
    %82 = vmatprep.subr.mxu0 0.0
    %83 = vmatpush1.msra.mxu0 0.0
    %84 = vmatprep.subr.mxu0 0.0
    %85 = vmatpush1.msra.mxu0 0.0
    %86 = vmatprep.subr.mxu0 0.0
    %87 = vmatpush1.msra.mxu0 0.0
    %88 = vmatprep.subr.mxu0 0.0
    %89 = vmatpush1.msra.mxu0 0.0
    %90 = vmatprep.subr.mxu0 0.0
    %91 = vmatpush1.msra.mxu0 0.0
    %92 = vmatprep.subr.mxu0 0.0
    %93 = vmatpush1.msra.mxu0 0.0
    %94 = vmatprep.subr.mxu0 0.0
    %95 = vmatpush1.msra.mxu0 0.0
    %96 = vmatprep.subr.mxu0 0.0
    %97 = vmatpush1.msra.mxu0 0.0
    %98 = vmatprep.subr.mxu0 0.0
    %99 = vmatpush1.msra.mxu0 0.0
    %100 = vmatprep.subr.mxu0 0.0
    %101 = vmatpush1.msra.mxu0 0.0
    %102 = vmatprep.subr.mxu0 0.0
    %103 = vmatpush1.msra.mxu0 0.0
    %104 = vmatprep.subr.mxu0 0.0
    %105 = vmatpush1.msra.mxu0 0.0
    %106 = vmatprep.subr.mxu0 0.0
    %107 = vmatpush1.msra.mxu0 0.0
    %108 = vmatprep.subr.mxu0 0.0
    %109 = vmatpush1.msra.mxu0 0.0
    %110 = vmatprep.subr.mxu0 0.0
    %111 = vmatpush1.msra.mxu0 0.0
    %112 = vmatprep.subr.mxu0 0.0
    %113 = vmatpush1.msra.mxu0 0.0
    %114 = vmatprep.subr.mxu0 0.0
    %115 = vmatpush1.msra.mxu0 0.0
    %116 = vmatprep.subr.mxu0 0.0
    %117 = vmatpush1.msra.mxu0 0.0
    %118 = vmatprep.subr.mxu0 0.0
    %119 = vmatpush1.msra.mxu0 0.0
    %120 = vmatprep.subr.mxu0 0.0
    %121 = vmatpush1.msra.mxu0 0.0
    %122 = vmatprep.subr.mxu0 0.0
    %123 = vmatpush1.msra.mxu0 0.0
    %124 = vmatprep.subr.mxu0 0.0
    %125 = vmatpush1.msra.mxu0 0.0
    %126 = vmatprep.subr.mxu0 0.0
    %127 = vmatpush1.msra.mxu0 0.0
    %128 = vmatprep.subr.mxu0 0.0
    %129 = vmatpush1.msra.mxu0 0.0
    %130 = vmatprep.subr.mxu0 0.0
    %131 = vmatpush1.msra.mxu0 0.0
    %132 = vmatprep.subr.mxu0 0.0
    %133 = vmatpush1.msra.mxu0 0.0
    %134 = vmatprep.subr.mxu0 0.0
    %135 = vmatpush1.msra.mxu0 0.0
    %136 = vmatprep.subr.mxu0 0.0
    %137 = vmatpush1.msra.mxu0 0.0
    %138 = vmatprep.subr.mxu0 0.0
    %139 = vmatpush1.msra.mxu0 0.0
    %140 = vmatprep.subr.mxu0 0.0
    %141 = vmatpush1.msra.mxu0 0.0
    %142 = vmatprep.mubr.f32.mxu0 0.0
    %v143 = vand.u32 %v70, 4294901760
    %v144 = vsub.f32 %v70, %v143
    %v145 = vand.u32 %v144, 4294901760
    %v146 = vsub.f32 %v144, %v145
    %v147 = vand.u32 %v146, 4294901760
    %148 = vmatmul.mubr.f32.gmra.mrb[0].mxu0 %v147
    %v149 = vpop.f32.mrb[0].mxu0
    %v150 = vadd.f32 0.0, %v149
    %v151 = vpop.f32.mrb[0].mxu0
    %152 = vdwg.mxu0
    %153 = vmatprep.subr.mxu0 0.0
    %v154 = vand.u32 %v18, 4294901760
    %v155 = vsub.f32 %v18, %v154
    %v156 = vand.u32 %v155, 4294901760
    %v157 = vsub.f32 %v155, %v156
    %v158 = vand.u32 %v157, 4294901760
    %159 = vmatpush1.msra.mxu0 %v158
    %160 = vmatprep.subr.mxu0 0.0
    %v161 = vand.u32 %v74, 4294901760
    %v162 = vsub.f32 %v74, %v161
    %v163 = vand.u32 %v162, 4294901760
    %v164 = vsub.f32 %v162, %v163
    %v165 = vand.u32 %v164, 4294901760
    %166 = vmatpush1.msra.mxu0 %v165
    %167 = vmatprep.subr.mxu0 0.0
    %168 = vmatpush1.msra.mxu0 0.0
    %169 = vmatprep.subr.mxu0 0.0
    %170 = vmatpush1.msra.mxu0 0.0
    %171 = vmatprep.subr.mxu0 0.0
    %172 = vmatpush1.msra.mxu0 0.0
    %173 = vmatprep.subr.mxu0 0.0
    %174 = vmatpush1.msra.mxu0 0.0
    %175 = vmatprep.subr.mxu0 0.0
    %176 = vmatpush1.msra.mxu0 0.0
    %177 = vmatprep.subr.mxu0 0.0
    %178 = vmatpush1.msra.mxu0 0.0
    %179 = vmatprep.subr.mxu0 0.0
    %180 = vmatpush1.msra.mxu0 0.0
    %181 = vmatprep.subr.mxu0 0.0
    %182 = vmatpush1.msra.mxu0 0.0
    %183 = vmatprep.subr.mxu0 0.0
    %184 = vmatpush1.msra.mxu0 0.0
    %185 = vmatprep.subr.mxu0 0.0
    %186 = vmatpush1.msra.mxu0 0.0
    %187 = vmatprep.subr.mxu0 0.0
    %188 = vmatpush1.msra.mxu0 0.0
    %189 = vmatprep.subr.mxu0 0.0
    %190 = vmatpush1.msra.mxu0 0.0
    %191 = vmatprep.subr.mxu0 0.0
    %192 = vmatpush1.msra.mxu0 0.0
    %193 = vmatprep.subr.mxu0 0.0
    %194 = vmatpush1.msra.mxu0 0.0
    %195 = vmatprep.subr.mxu0 0.0
    %196 = vmatpush1.msra.mxu0 0.0
    %197 = vmatprep.subr.mxu0 0.0
    %198 = vmatpush1.msra.mxu0 0.0
    %199 = vmatprep.subr.mxu0 0.0
    %200 = vmatpush1.msra.mxu0 0.0
    %201 = vmatprep.subr.mxu0 0.0
    %202 = vmatpush1.msra.mxu0 0.0
    %203 = vmatprep.subr.mxu0 0.0
    %204 = vmatpush1.msra.mxu0 0.0
    %205 = vmatprep.subr.mxu0 0.0
    %206 = vmatpush1.msra.mxu0 0.0
    %207 = vmatprep.subr.mxu0 0.0
    %208 = vmatpush1.msra.mxu0 0.0
    %209 = vmatprep.subr.mxu0 0.0
    %210 = vmatpush1.msra.mxu0 0.0
    %211 = vmatprep.subr.mxu0 0.0
    %212 = vmatpush1.msra.mxu0 0.0
    %213 = vmatprep.subr.mxu0 0.0
    %214 = vmatpush1.msra.mxu0 0.0
    %215 = vmatprep.subr.mxu0 0.0
    %216 = vmatpush1.msra.mxu0 0.0
    %217 = vmatprep.subr.mxu0 0.0
    %218 = vmatpush1.msra.mxu0 0.0
    %219 = vmatprep.subr.mxu0 0.0
    %220 = vmatpush1.msra.mxu0 0.0
    %221 = vmatprep.subr.mxu0 0.0
    %222 = vmatpush1.msra.mxu0 0.0
    %223 = vmatprep.subr.mxu0 0.0
    %224 = vmatpush1.msra.mxu0 0.0
    %225 = vmatprep.subr.mxu0 0.0
    %226 = vmatpush1.msra.mxu0 0.0
    %227 = vmatprep.mubr.f32.mxu0 0.0
    %v228 = vand.u32 %v70, 4294901760
    %229 = vmatmul.mubr.f32.gmra.mrb[0].mxu0 %v228
    %v230 = vpop.f32.mrb[0].mxu0
    %v231 = vadd.f32 %v150, %v230
    %v232 = vpop.f32.mrb[0].mxu0
    %233 = vdwg.mxu0
    %234 = vmatprep.subr.mxu0 0.0
    %v235 = vand.u32 %v18, 4294901760
    %v236 = vsub.f32 %v18, %v235
    %237 = vmatpush1.msra.mxu0 %v236
    %238 = vmatprep.subr.mxu0 0.0
    %v239 = vand.u32 %v74, 4294901760
    %v240 = vsub.f32 %v74, %v239
    %241 = vmatpush1.msra.mxu0 %v240
    %242 = vmatprep.subr.mxu0 0.0
    %243 = vmatpush1.msra.mxu0 0.0
    %244 = vmatprep.subr.mxu0 0.0
    %245 = vmatpush1.msra.mxu0 0.0
    %246 = vmatprep.subr.mxu0 0.0
    %247 = vmatpush1.msra.mxu0 0.0
    %248 = vmatprep.subr.mxu0 0.0
    %249 = vmatpush1.msra.mxu0 0.0
    %250 = vmatprep.subr.mxu0 0.0
    %251 = vmatpush1.msra.mxu0 0.0
    %252 = vmatprep.subr.mxu0 0.0
    %253 = vmatpush1.msra.mxu0 0.0
    %254 = vmatprep.subr.mxu0 0.0
    %255 = vmatpush1.msra.mxu0 0.0
    %256 = vmatprep.subr.mxu0 0.0
    %257 = vmatpush1.msra.mxu0 0.0
    %258 = vmatprep.subr.mxu0 0.0
    %259 = vmatpush1.msra.mxu0 0.0
    %260 = vmatprep.subr.mxu0 0.0
    %261 = vmatpush1.msra.mxu0 0.0
    %262 = vmatprep.subr.mxu0 0.0
    %263 = vmatpush1.msra.mxu0 0.0
    %264 = vmatprep.subr.mxu0 0.0
    %265 = vmatpush1.msra.mxu0 0.0
    %266 = vmatprep.subr.mxu0 0.0
    %267 = vmatpush1.msra.mxu0 0.0
    %268 = vmatprep.subr.mxu0 0.0
    %269 = vmatpush1.msra.mxu0 0.0
    %270 = vmatprep.subr.mxu0 0.0
    %271 = vmatpush1.msra.mxu0 0.0
    %272 = vmatprep.subr.mxu0 0.0
    %273 = vmatpush1.msra.mxu0 0.0
    %274 = vmatprep.subr.mxu0 0.0
    %275 = vmatpush1.msra.mxu0 0.0
    %276 = vmatprep.subr.mxu0 0.0
    %277 = vmatpush1.msra.mxu0 0.0
    %278 = vmatprep.subr.mxu0 0.0
    %279 = vmatpush1.msra.mxu0 0.0
    %280 = vmatprep.subr.mxu0 0.0
    %281 = vmatpush1.msra.mxu0 0.0
    %282 = vmatprep.subr.mxu0 0.0
    %283 = vmatpush1.msra.mxu0 0.0
    %284 = vmatprep.subr.mxu0 0.0
    %285 = vmatpush1.msra.mxu0 0.0
    %286 = vmatprep.subr.mxu0 0.0
    %287 = vmatpush1.msra.mxu0 0.0
    %288 = vmatprep.subr.mxu0 0.0
    %289 = vmatpush1.msra.mxu0 0.0
    %290 = vmatprep.subr.mxu0 0.0
    %291 = vmatpush1.msra.mxu0 0.0
    %292 = vmatprep.subr.mxu0 0.0
    %293 = vmatpush1.msra.mxu0 0.0
    %294 = vmatprep.subr.mxu0 0.0
    %295 = vmatpush1.msra.mxu0 0.0
    %296 = vmatprep.subr.mxu0 0.0
    %297 = vmatpush1.msra.mxu0 0.0
    %298 = vmatprep.subr.mxu0 0.0
    %299 = vmatpush1.msra.mxu0 0.0
    %300 = vmatprep.subr.mxu0 0.0
    %301 = vmatpush1.msra.mxu0 0.0
    %302 = vmatprep.mubr.f32.mxu0 0.0
    %v303 = vand.u32 %v70, 4294901760
    %v304 = vsub.f32 %v70, %v303
    %305 = vmatmul.mubr.f32.gmra.mrb[0].mxu0 %v304
    %v306 = vpop.f32.mrb[0].mxu0
    %v307 = vadd.f32 %v231, %v306
    %v308 = vpop.f32.mrb[0].mxu0
    %309 = vdwg.mxu0
    %310 = vmatprep.subr.mxu0 0.0
    %v311 = vand.u32 %v18, 4294901760
    %312 = vmatpush1.msra.mxu0 %v311
    %313 = vmatprep.subr.mxu0 0.0
    %v314 = vand.u32 %v74, 4294901760
    %315 = vmatpush1.msra.mxu0 %v314
    %316 = vmatprep.subr.mxu0 0.0
    %317 = vmatpush1.msra.mxu0 0.0
    %318 = vmatprep.subr.mxu0 0.0
    %319 = vmatpush1.msra.mxu0 0.0
    %320 = vmatprep.subr.mxu0 0.0
    %321 = vmatpush1.msra.mxu0 0.0
    %322 = vmatprep.subr.mxu0 0.0
    %323 = vmatpush1.msra.mxu0 0.0
    %324 = vmatprep.subr.mxu0 0.0
    %325 = vmatpush1.msra.mxu0 0.0
    %326 = vmatprep.subr.mxu0 0.0
    %327 = vmatpush1.msra.mxu0 0.0
    %328 = vmatprep.subr.mxu0 0.0
    %329 = vmatpush1.msra.mxu0 0.0
    %330 = vmatprep.subr.mxu0 0.0
    %331 = vmatpush1.msra.mxu0 0.0
    %332 = vmatprep.subr.mxu0 0.0
    %333 = vmatpush1.msra.mxu0 0.0
    %334 = vmatprep.subr.mxu0 0.0
    %335 = vmatpush1.msra.mxu0 0.0
    %336 = vmatprep.subr.mxu0 0.0
    %337 = vmatpush1.msra.mxu0 0.0
    %338 = vmatprep.subr.mxu0 0.0
    %339 = vmatpush1.msra.mxu0 0.0
    %340 = vmatprep.subr.mxu0 0.0
    %341 = vmatpush1.msra.mxu0 0.0
    %342 = vmatprep.subr.mxu0 0.0
    %343 = vmatpush1.msra.mxu0 0.0
    %344 = vmatprep.subr.mxu0 0.0
    %345 = vmatpush1.msra.mxu0 0.0
    %346 = vmatprep.subr.mxu0 0.0
    %347 = vmatpush1.msra.mxu0 0.0
    %348 = vmatprep.subr.mxu0 0.0
    %349 = vmatpush1.msra.mxu0 0.0
    %350 = vmatprep.subr.mxu0 0.0
    %351 = vmatpush1.msra.mxu0 0.0
    %352 = vmatprep.subr.mxu0 0.0
    %353 = vmatpush1.msra.mxu0 0.0
    %354 = vmatprep.subr.mxu0 0.0
    %355 = vmatpush1.msra.mxu0 0.0
    %356 = vmatprep.subr.mxu0 0.0
    %357 = vmatpush1.msra.mxu0 0.0
    %358 = vmatprep.subr.mxu0 0.0
    %359 = vmatpush1.msra.mxu0 0.0
    %360 = vmatprep.subr.mxu0 0.0
    %361 = vmatpush1.msra.mxu0 0.0
    %362 = vmatprep.subr.mxu0 0.0
    %363 = vmatpush1.msra.mxu0 0.0
    %364 = vmatprep.subr.mxu0 0.0
    %365 = vmatpush1.msra.mxu0 0.0
    %366 = vmatprep.subr.mxu0 0.0
    %367 = vmatpush1.msra.mxu0 0.0
    %368 = vmatprep.subr.mxu0 0.0
    %369 = vmatpush1.msra.mxu0 0.0
    %370 = vmatprep.subr.mxu0 0.0
    %371 = vmatpush1.msra.mxu0 0.0
    %372 = vmatprep.subr.mxu0 0.0
    %373 = vmatpush1.msra.mxu0 0.0
    %374 = vmatprep.subr.mxu0 0.0
    %375 = vmatpush1.msra.mxu0 0.0
    %376 = vmatprep.mubr.f32.mxu0 0.0
    %v377 = vand.u32 %v70, 4294901760
    %v378 = vsub.f32 %v70, %v377
    %v379 = vand.u32 %v378, 4294901760
    %380 = vmatmul.mubr.f32.gmra.mrb[0].mxu0 %v379
    %v381 = vpop.f32.mrb[0].mxu0
    %v382 = vadd.f32 %v307, %v381
    %v383 = vpop.f32.mrb[0].mxu0
    %384 = vdwg.mxu0
    %385 = vmatprep.subr.mxu0 0.0
    %v386 = vand.u32 %v18, 4294901760
    %v387 = vsub.f32 %v18, %v386
    %v388 = vand.u32 %v387, 4294901760
    %389 = vmatpush1.msra.mxu0 %v388
    %390 = vmatprep.subr.mxu0 0.0
    %v391 = vand.u32 %v74, 4294901760
    %v392 = vsub.f32 %v74, %v391
    %v393 = vand.u32 %v392, 4294901760
    %394 = vmatpush1.msra.mxu0 %v393
    %395 = vmatprep.subr.mxu0 0.0
    %396 = vmatpush1.msra.mxu0 0.0
    %397 = vmatprep.subr.mxu0 0.0
    %398 = vmatpush1.msra.mxu0 0.0
    %399 = vmatprep.subr.mxu0 0.0
    %400 = vmatpush1.msra.mxu0 0.0
    %401 = vmatprep.subr.mxu0 0.0
    %402 = vmatpush1.msra.mxu0 0.0
    %403 = vmatprep.subr.mxu0 0.0
    %404 = vmatpush1.msra.mxu0 0.0
    %405 = vmatprep.subr.mxu0 0.0
    %406 = vmatpush1.msra.mxu0 0.0
    %407 = vmatprep.subr.mxu0 0.0
    %408 = vmatpush1.msra.mxu0 0.0
    %409 = vmatprep.subr.mxu0 0.0
    %410 = vmatpush1.msra.mxu0 0.0
    %411 = vmatprep.subr.mxu0 0.0
    %412 = vmatpush1.msra.mxu0 0.0
    %413 = vmatprep.subr.mxu0 0.0
    %414 = vmatpush1.msra.mxu0 0.0
    %415 = vmatprep.subr.mxu0 0.0
    %416 = vmatpush1.msra.mxu0 0.0
    %417 = vmatprep.subr.mxu0 0.0
    %418 = vmatpush1.msra.mxu0 0.0
    %419 = vmatprep.subr.mxu0 0.0
    %420 = vmatpush1.msra.mxu0 0.0
    %421 = vmatprep.subr.mxu0 0.0
    %422 = vmatpush1.msra.mxu0 0.0
    %423 = vmatprep.subr.mxu0 0.0
    %424 = vmatpush1.msra.mxu0 0.0
    %425 = vmatprep.subr.mxu0 0.0
    %426 = vmatpush1.msra.mxu0 0.0
    %427 = vmatprep.subr.mxu0 0.0
    %428 = vmatpush1.msra.mxu0 0.0
    %429 = vmatprep.subr.mxu0 0.0
    %430 = vmatpush1.msra.mxu0 0.0
    %431 = vmatprep.subr.mxu0 0.0
    %432 = vmatpush1.msra.mxu0 0.0
    %433 = vmatprep.subr.mxu0 0.0
    %434 = vmatpush1.msra.mxu0 0.0
    %435 = vmatprep.subr.mxu0 0.0
    %436 = vmatpush1.msra.mxu0 0.0
    %437 = vmatprep.subr.mxu0 0.0
    %438 = vmatpush1.msra.mxu0 0.0
    %439 = vmatprep.subr.mxu0 0.0
    %440 = vmatpush1.msra.mxu0 0.0
    %441 = vmatprep.subr.mxu0 0.0
    %442 = vmatpush1.msra.mxu0 0.0
    %443 = vmatprep.subr.mxu0 0.0
    %444 = vmatpush1.msra.mxu0 0.0
    %445 = vmatprep.subr.mxu0 0.0
    %446 = vmatpush1.msra.mxu0 0.0
    %447 = vmatprep.subr.mxu0 0.0
    %448 = vmatpush1.msra.mxu0 0.0
    %449 = vmatprep.subr.mxu0 0.0
    %450 = vmatpush1.msra.mxu0 0.0
    %451 = vmatprep.subr.mxu0 0.0
    %452 = vmatpush1.msra.mxu0 0.0
    %453 = vmatprep.subr.mxu0 0.0
    %454 = vmatpush1.msra.mxu0 0.0
    %455 = vmatprep.mubr.f32.mxu0 0.0
    %v456 = vand.u32 %v70, 4294901760
    %457 = vmatmul.mubr.f32.gmra.mrb[0].mxu0 %v456
    %v458 = vpop.f32.mrb[0].mxu0
    %v459 = vadd.f32 %v382, %v458
    %v460 = vpop.f32.mrb[0].mxu0
    %461 = vdwg.mxu0
    %462 = vmatprep.subr.mxu0 0.0
    %v463 = vand.u32 %v18, 4294901760
    %464 = vmatpush1.msra.mxu0 %v463
    %465 = vmatprep.subr.mxu0 0.0
    %v466 = vand.u32 %v74, 4294901760
    %467 = vmatpush1.msra.mxu0 %v466
    %468 = vmatprep.subr.mxu0 0.0
    %469 = vmatpush1.msra.mxu0 0.0
    %470 = vmatprep.subr.mxu0 0.0
    %471 = vmatpush1.msra.mxu0 0.0
    %472 = vmatprep.subr.mxu0 0.0
    %473 = vmatpush1.msra.mxu0 0.0
    %474 = vmatprep.subr.mxu0 0.0
    %475 = vmatpush1.msra.mxu0 0.0
    %476 = vmatprep.subr.mxu0 0.0
    %477 = vmatpush1.msra.mxu0 0.0
    %478 = vmatprep.subr.mxu0 0.0
    %479 = vmatpush1.msra.mxu0 0.0
    %480 = vmatprep.subr.mxu0 0.0
    %481 = vmatpush1.msra.mxu0 0.0
    %482 = vmatprep.subr.mxu0 0.0
    %483 = vmatpush1.msra.mxu0 0.0
    %484 = vmatprep.subr.mxu0 0.0
    %485 = vmatpush1.msra.mxu0 0.0
    %486 = vmatprep.subr.mxu0 0.0
    %487 = vmatpush1.msra.mxu0 0.0
    %488 = vmatprep.subr.mxu0 0.0
    %489 = vmatpush1.msra.mxu0 0.0
    %490 = vmatprep.subr.mxu0 0.0
    %491 = vmatpush1.msra.mxu0 0.0
    %492 = vmatprep.subr.mxu0 0.0
    %493 = vmatpush1.msra.mxu0 0.0
    %494 = vmatprep.subr.mxu0 0.0
    %495 = vmatpush1.msra.mxu0 0.0
    %496 = vmatprep.subr.mxu0 0.0
    %497 = vmatpush1.msra.mxu0 0.0
    %498 = vmatprep.subr.mxu0 0.0
    %499 = vmatpush1.msra.mxu0 0.0
    %500 = vmatprep.subr.mxu0 0.0
    %501 = vmatpush1.msra.mxu0 0.0
    %502 = vmatprep.subr.mxu0 0.0
    %503 = vmatpush1.msra.mxu0 0.0
    %504 = vmatprep.subr.mxu0 0.0
    %505 = vmatpush1.msra.mxu0 0.0
    %506 = vmatprep.subr.mxu0 0.0
    %507 = vmatpush1.msra.mxu0 0.0
    %508 = vmatprep.subr.mxu0 0.0
    %509 = vmatpush1.msra.mxu0 0.0
    %510 = vmatprep.subr.mxu0 0.0
    %511 = vmatpush1.msra.mxu0 0.0
    %512 = vmatprep.subr.mxu0 0.0
    %513 = vmatpush1.msra.mxu0 0.0
    %514 = vmatprep.subr.mxu0 0.0
    %515 = vmatpush1.msra.mxu0 0.0
    %516 = vmatprep.subr.mxu0 0.0
    %517 = vmatpush1.msra.mxu0 0.0
    %518 = vmatprep.subr.mxu0 0.0
    %519 = vmatpush1.msra.mxu0 0.0
    %520 = vmatprep.subr.mxu0 0.0
    %521 = vmatpush1.msra.mxu0 0.0
    %522 = vmatprep.subr.mxu0 0.0
    %523 = vmatpush1.msra.mxu0 0.0
    %524 = vmatprep.subr.mxu0 0.0
    %525 = vmatpush1.msra.mxu0 0.0
    %526 = vmatprep.subr.mxu0 0.0
    %527 = vmatpush1.msra.mxu0 0.0
    %528 = vmatprep.mubr.f32.mxu0 0.0
    %v529 = vand.u32 %v70, 4294901760
    %530 = vmatmul.mubr.f32.gmra.mrb[0].mxu0 %v529
    %v531 = vpop.f32.mrb[0].mxu0
    %v532 = vadd.f32 %v459, %v531
    %v533 = vpop.f32.mrb[0].mxu0
    %534 = vdwg.mxu0
    %v535 = vsel %vm38, 1.0, %v532
    %v536 = vlog2.pop %v535
    %v537 = vmul.f32 %v536, 0.6931472
    %v538 = vrcp.pop %v535
    %v539 = vmul.f32 1.0, %v538
    %540 = vmatprep.subr.mxu0 0.0
    %v541 = vand.u32 %v20, 4294901760
    %542 = vmatpush1.msra.mxu0 %v541
    %543 = vmatprep.subr.mxu0 0.0
    %v544 = vand.u32 %v21, 4294901760
    %545 = vmatpush1.msra.mxu0 %v544
    %546 = vmatprep.subr.mxu0 0.0
    %v547 = vand.u32 %v22, 4294901760
    %548 = vmatpush1.msra.mxu0 %v547
    %549 = vmatprep.subr.mxu0 0.0
    %v550 = vand.u32 %v23, 4294901760
    %551 = vmatpush1.msra.mxu0 %v550
    %552 = vmatprep.subr.mxu0 0.0
    %v553 = vand.u32 %v24, 4294901760
    %554 = vmatpush1.msra.mxu0 %v553
    %555 = vmatprep.subr.mxu0 0.0
    %v556 = vand.u32 %v25, 4294901760
    %557 = vmatpush1.msra.mxu0 %v556
    %558 = vmatprep.subr.mxu0 0.0
    %v559 = vand.u32 %v26, 4294901760
    %560 = vmatpush1.msra.mxu0 %v559
    %561 = vmatprep.subr.mxu0 0.0
    %v562 = vand.u32 %v27, 4294901760
    %563 = vmatpush1.msra.mxu0 %v562
    %564 = vmatprep.subr.mxu0 0.0
    %v565 = vand.u32 %v28, 4294901760
    %566 = vmatpush1.msra.mxu0 %v565
    %567 = vmatprep.subr.mxu0 0.0
    %v568 = vand.u32 %v29, 4294901760
    %569 = vmatpush1.msra.mxu0 %v568
    %570 = vmatprep.subr.mxu0 0.0
    %v571 = vand.u32 %v30, 4294901760
    %572 = vmatpush1.msra.mxu0 %v571
    %573 = vmatprep.subr.mxu0 0.0
    %v574 = vand.u32 %v31, 4294901760
    %575 = vmatpush1.msra.mxu0 %v574
    %576 = vmatprep.subr.mxu0 0.0
    %v577 = vand.u32 %v32, 4294901760
    %578 = vmatpush1.msra.mxu0 %v577
    %579 = vmatprep.subr.mxu0 0.0
    %v580 = vand.u32 %v33, 4294901760
    %581 = vmatpush1.msra.mxu0 %v580
    %582 = vmatprep.subr.mxu0 0.0
    %v583 = vand.u32 %v34, 4294901760
    %584 = vmatpush1.msra.mxu0 %v583
    %585 = vmatprep.subr.mxu0 0.0
    %v586 = vand.u32 %v35, 4294901760
    %587 = vmatpush1.msra.mxu0 %v586
    %588 = vmatprep.subr.mxu0 0.0
    %589 = vmatpush1.msra.mxu0 0.0
    %590 = vmatprep.subr.mxu0 0.0
    %591 = vmatpush1.msra.mxu0 0.0
    %592 = vmatprep.subr.mxu0 0.0
    %593 = vmatpush1.msra.mxu0 0.0
    %594 = vmatprep.subr.mxu0 0.0
    %595 = vmatpush1.msra.mxu0 0.0
    %596 = vmatprep.subr.mxu0 0.0
    %597 = vmatpush1.msra.mxu0 0.0
    %598 = vmatprep.subr.mxu0 0.0
    %599 = vmatpush1.msra.mxu0 0.0
    %600 = vmatprep.subr.mxu0 0.0
    %601 = vmatpush1.msra.mxu0 0.0
    %602 = vmatprep.subr.mxu0 0.0
    %603 = vmatpush1.msra.mxu0 0.0
    %604 = vmatprep.subr.mxu0 0.0
    %605 = vmatpush1.msra.mxu0 0.0
    %606 = vmatprep.subr.mxu0 0.0
    %607 = vmatpush1.msra.mxu0 0.0
    %608 = vmatprep.subr.mxu0 0.0
    %609 = vmatpush1.msra.mxu0 0.0
    %610 = vmatprep.subr.mxu0 0.0
    %611 = vmatpush1.msra.mxu0 0.0
    %612 = vmatprep.subr.mxu0 0.0
    %613 = vmatpush1.msra.mxu0 0.0
    %614 = vmatprep.subr.mxu0 0.0
    %615 = vmatpush1.msra.mxu0 0.0
    %616 = vmatprep.subr.mxu0 0.0
    %617 = vmatpush1.msra.mxu0 0.0
    %618 = vmatprep.subr.mxu0 0.0
    %619 = vmatpush1.msra.mxu0 0.0
    %620 = vmatprep.mubr.f32.mxu0 0.0
    %v621 = vand.u32 %v537, 4294901760
    %v622 = vsub.f32 %v537, %v621
    %v623 = vand.u32 %v622, 4294901760
    %v624 = vsub.f32 %v622, %v623
    %v625 = vand.u32 %v624, 4294901760
    %626 = vmatmul.mubr.f32.gmra.mrb[0].mxu0 %v625
    %v627 = vpop.f32.mrb[0].mxu0
    %v628 = vadd.f32 0.0, %v627
    %v629 = vpop.f32.mrb[0].mxu0
    %630 = vdwg.mxu0
    %631 = vmatprep.subr.mxu0 0.0
    %v632 = vand.u32 %v20, 4294901760
    %v633 = vsub.f32 %v20, %v632
    %v634 = vand.u32 %v633, 4294901760
    %v635 = vsub.f32 %v633, %v634
    %v636 = vand.u32 %v635, 4294901760
    %637 = vmatpush1.msra.mxu0 %v636
    %638 = vmatprep.subr.mxu0 0.0
    %v639 = vand.u32 %v21, 4294901760
    %v640 = vsub.f32 %v21, %v639
    %v641 = vand.u32 %v640, 4294901760
    %v642 = vsub.f32 %v640, %v641
    %v643 = vand.u32 %v642, 4294901760
    %644 = vmatpush1.msra.mxu0 %v643
    %645 = vmatprep.subr.mxu0 0.0
    %v646 = vand.u32 %v22, 4294901760
    %v647 = vsub.f32 %v22, %v646
    %v648 = vand.u32 %v647, 4294901760
    %v649 = vsub.f32 %v647, %v648
    %v650 = vand.u32 %v649, 4294901760
    %651 = vmatpush1.msra.mxu0 %v650
    %652 = vmatprep.subr.mxu0 0.0
    %v653 = vand.u32 %v23, 4294901760
    %v654 = vsub.f32 %v23, %v653
    %v655 = vand.u32 %v654, 4294901760
    %v656 = vsub.f32 %v654, %v655
    %v657 = vand.u32 %v656, 4294901760
    %658 = vmatpush1.msra.mxu0 %v657
    %659 = vmatprep.subr.mxu0 0.0
    %v660 = vand.u32 %v24, 4294901760
    %v661 = vsub.f32 %v24, %v660
    %v662 = vand.u32 %v661, 4294901760
    %v663 = vsub.f32 %v661, %v662
    %v664 = vand.u32 %v663, 4294901760
    %665 = vmatpush1.msra.mxu0 %v664
    %666 = vmatprep.subr.mxu0 0.0
    %v667 = vand.u32 %v25, 4294901760
    %v668 = vsub.f32 %v25, %v667
    %v669 = vand.u32 %v668, 4294901760
    %v670 = vsub.f32 %v668, %v669
    %v671 = vand.u32 %v670, 4294901760
    %672 = vmatpush1.msra.mxu0 %v671
    %673 = vmatprep.subr.mxu0 0.0
    %v674 = vand.u32 %v26, 4294901760
    %v675 = vsub.f32 %v26, %v674
    %v676 = vand.u32 %v675, 4294901760
    %v677 = vsub.f32 %v675, %v676
    %v678 = vand.u32 %v677, 4294901760
    %679 = vmatpush1.msra.mxu0 %v678
    %680 = vmatprep.subr.mxu0 0.0
    %v681 = vand.u32 %v27, 4294901760
    %v682 = vsub.f32 %v27, %v681
    %v683 = vand.u32 %v682, 4294901760
    %v684 = vsub.f32 %v682, %v683
    %v685 = vand.u32 %v684, 4294901760
    %686 = vmatpush1.msra.mxu0 %v685
    %687 = vmatprep.subr.mxu0 0.0
    %v688 = vand.u32 %v28, 4294901760
    %v689 = vsub.f32 %v28, %v688
    %v690 = vand.u32 %v689, 4294901760
    %v691 = vsub.f32 %v689, %v690
    %v692 = vand.u32 %v691, 4294901760
    %693 = vmatpush1.msra.mxu0 %v692
    %694 = vmatprep.subr.mxu0 0.0
    %v695 = vand.u32 %v29, 4294901760
    %v696 = vsub.f32 %v29, %v695
    %v697 = vand.u32 %v696, 4294901760
    %v698 = vsub.f32 %v696, %v697
    %v699 = vand.u32 %v698, 4294901760
    %700 = vmatpush1.msra.mxu0 %v699
    %701 = vmatprep.subr.mxu0 0.0
    %v702 = vand.u32 %v30, 4294901760
    %v703 = vsub.f32 %v30, %v702
    %v704 = vand.u32 %v703, 4294901760
    %v705 = vsub.f32 %v703, %v704
    %v706 = vand.u32 %v705, 4294901760
    %707 = vmatpush1.msra.mxu0 %v706
    %708 = vmatprep.subr.mxu0 0.0
    %v709 = vand.u32 %v31, 4294901760
    %v710 = vsub.f32 %v31, %v709
    %v711 = vand.u32 %v710, 4294901760
    %v712 = vsub.f32 %v710, %v711
    %v713 = vand.u32 %v712, 4294901760
    %714 = vmatpush1.msra.mxu0 %v713
    %715 = vmatprep.subr.mxu0 0.0
    %v716 = vand.u32 %v32, 4294901760
    %v717 = vsub.f32 %v32, %v716
    %v718 = vand.u32 %v717, 4294901760
    %v719 = vsub.f32 %v717, %v718
    %v720 = vand.u32 %v719, 4294901760
    %721 = vmatpush1.msra.mxu0 %v720
    %722 = vmatprep.subr.mxu0 0.0
    %v723 = vand.u32 %v33, 4294901760
    %v724 = vsub.f32 %v33, %v723
    %v725 = vand.u32 %v724, 4294901760
    %v726 = vsub.f32 %v724, %v725
    %v727 = vand.u32 %v726, 4294901760
    %728 = vmatpush1.msra.mxu0 %v727
    %729 = vmatprep.subr.mxu0 0.0
    %v730 = vand.u32 %v34, 4294901760
    %v731 = vsub.f32 %v34, %v730
    %v732 = vand.u32 %v731, 4294901760
    %v733 = vsub.f32 %v731, %v732
    %v734 = vand.u32 %v733, 4294901760
    %735 = vmatpush1.msra.mxu0 %v734
    %736 = vmatprep.subr.mxu0 0.0
    %v737 = vand.u32 %v35, 4294901760
    %v738 = vsub.f32 %v35, %v737
    %v739 = vand.u32 %v738, 4294901760
    %v740 = vsub.f32 %v738, %v739
    %v741 = vand.u32 %v740, 4294901760
    %742 = vmatpush1.msra.mxu0 %v741
    %743 = vmatprep.subr.mxu0 0.0
    %744 = vmatpush1.msra.mxu0 0.0
    %745 = vmatprep.subr.mxu0 0.0
    %746 = vmatpush1.msra.mxu0 0.0
    %747 = vmatprep.subr.mxu0 0.0
    %748 = vmatpush1.msra.mxu0 0.0
    %749 = vmatprep.subr.mxu0 0.0
    %750 = vmatpush1.msra.mxu0 0.0
    %751 = vmatprep.subr.mxu0 0.0
    %752 = vmatpush1.msra.mxu0 0.0
    %753 = vmatprep.subr.mxu0 0.0
    %754 = vmatpush1.msra.mxu0 0.0
    %755 = vmatprep.subr.mxu0 0.0
    %756 = vmatpush1.msra.mxu0 0.0
    %757 = vmatprep.subr.mxu0 0.0
    %758 = vmatpush1.msra.mxu0 0.0
    %759 = vmatprep.subr.mxu0 0.0
    %760 = vmatpush1.msra.mxu0 0.0
    %761 = vmatprep.subr.mxu0 0.0
    %762 = vmatpush1.msra.mxu0 0.0
    %763 = vmatprep.subr.mxu0 0.0
    %764 = vmatpush1.msra.mxu0 0.0
    %765 = vmatprep.subr.mxu0 0.0
    %766 = vmatpush1.msra.mxu0 0.0
    %767 = vmatprep.subr.mxu0 0.0
    %768 = vmatpush1.msra.mxu0 0.0
    %769 = vmatprep.subr.mxu0 0.0
    %770 = vmatpush1.msra.mxu0 0.0
    %771 = vmatprep.subr.mxu0 0.0
    %772 = vmatpush1.msra.mxu0 0.0
    %773 = vmatprep.subr.mxu0 0.0
    %774 = vmatpush1.msra.mxu0 0.0
    %775 = vmatprep.mubr.f32.mxu0 0.0
    %v776 = vand.u32 %v537, 4294901760
    %777 = vmatmul.mubr.f32.gmra.mrb[0].mxu0 %v776
    %v778 = vpop.f32.mrb[0].mxu0
    %v779 = vadd.f32 %v628, %v778
    %v780 = vpop.f32.mrb[0].mxu0
    %781 = vdwg.mxu0
    %782 = vmatprep.subr.mxu0 0.0
    %v783 = vand.u32 %v20, 4294901760
    %v784 = vsub.f32 %v20, %v783
    %785 = vmatpush1.msra.mxu0 %v784
    %786 = vmatprep.subr.mxu0 0.0
    %v787 = vand.u32 %v21, 4294901760
    %v788 = vsub.f32 %v21, %v787
    %789 = vmatpush1.msra.mxu0 %v788
    %790 = vmatprep.subr.mxu0 0.0
    %v791 = vand.u32 %v22, 4294901760
    %v792 = vsub.f32 %v22, %v791
    %793 = vmatpush1.msra.mxu0 %v792
    %794 = vmatprep.subr.mxu0 0.0
    %v795 = vand.u32 %v23, 4294901760
    %v796 = vsub.f32 %v23, %v795
    %797 = vmatpush1.msra.mxu0 %v796
    %798 = vmatprep.subr.mxu0 0.0
    %v799 = vand.u32 %v24, 4294901760
    %v800 = vsub.f32 %v24, %v799
    %801 = vmatpush1.msra.mxu0 %v800
    %802 = vmatprep.subr.mxu0 0.0
    %v803 = vand.u32 %v25, 4294901760
    %v804 = vsub.f32 %v25, %v803
    %805 = vmatpush1.msra.mxu0 %v804
    %806 = vmatprep.subr.mxu0 0.0
    %v807 = vand.u32 %v26, 4294901760
    %v808 = vsub.f32 %v26, %v807
    %809 = vmatpush1.msra.mxu0 %v808
    %810 = vmatprep.subr.mxu0 0.0
    %v811 = vand.u32 %v27, 4294901760
    %v812 = vsub.f32 %v27, %v811
    %813 = vmatpush1.msra.mxu0 %v812
    %814 = vmatprep.subr.mxu0 0.0
    %v815 = vand.u32 %v28, 4294901760
    %v816 = vsub.f32 %v28, %v815
    %817 = vmatpush1.msra.mxu0 %v816
    %818 = vmatprep.subr.mxu0 0.0
    %v819 = vand.u32 %v29, 4294901760
    %v820 = vsub.f32 %v29, %v819
    %821 = vmatpush1.msra.mxu0 %v820
    %822 = vmatprep.subr.mxu0 0.0
    %v823 = vand.u32 %v30, 4294901760
    %v824 = vsub.f32 %v30, %v823
    %825 = vmatpush1.msra.mxu0 %v824
    %826 = vmatprep.subr.mxu0 0.0
    %v827 = vand.u32 %v31, 4294901760
    %v828 = vsub.f32 %v31, %v827
    %829 = vmatpush1.msra.mxu0 %v828
    %830 = vmatprep.subr.mxu0 0.0
    %v831 = vand.u32 %v32, 4294901760
    %v832 = vsub.f32 %v32, %v831
    %833 = vmatpush1.msra.mxu0 %v832
    %834 = vmatprep.subr.mxu0 0.0
    %v835 = vand.u32 %v33, 4294901760
    %v836 = vsub.f32 %v33, %v835
    %837 = vmatpush1.msra.mxu0 %v836
    %838 = vmatprep.subr.mxu0 0.0
    %v839 = vand.u32 %v34, 4294901760
    %v840 = vsub.f32 %v34, %v839
    %841 = vmatpush1.msra.mxu0 %v840
    %842 = vmatprep.subr.mxu0 0.0
    %v843 = vand.u32 %v35, 4294901760
    %v844 = vsub.f32 %v35, %v843
    %845 = vmatpush1.msra.mxu0 %v844
    %846 = vmatprep.subr.mxu0 0.0
    %847 = vmatpush1.msra.mxu0 0.0
    %848 = vmatprep.subr.mxu0 0.0
    %849 = vmatpush1.msra.mxu0 0.0
    %850 = vmatprep.subr.mxu0 0.0
    %851 = vmatpush1.msra.mxu0 0.0
    %852 = vmatprep.subr.mxu0 0.0
    %853 = vmatpush1.msra.mxu0 0.0
    %854 = vmatprep.subr.mxu0 0.0
    %855 = vmatpush1.msra.mxu0 0.0
    %856 = vmatprep.subr.mxu0 0.0
    %857 = vmatpush1.msra.mxu0 0.0
    %858 = vmatprep.subr.mxu0 0.0
    %859 = vmatpush1.msra.mxu0 0.0
    %860 = vmatprep.subr.mxu0 0.0
    %861 = vmatpush1.msra.mxu0 0.0
    %862 = vmatprep.subr.mxu0 0.0
    %863 = vmatpush1.msra.mxu0 0.0
    %864 = vmatprep.subr.mxu0 0.0
    %865 = vmatpush1.msra.mxu0 0.0
    %866 = vmatprep.subr.mxu0 0.0
    %867 = vmatpush1.msra.mxu0 0.0
    %868 = vmatprep.subr.mxu0 0.0
    %869 = vmatpush1.msra.mxu0 0.0
    %870 = vmatprep.subr.mxu0 0.0
    %871 = vmatpush1.msra.mxu0 0.0
    %872 = vmatprep.subr.mxu0 0.0
    %873 = vmatpush1.msra.mxu0 0.0
    %874 = vmatprep.subr.mxu0 0.0
    %875 = vmatpush1.msra.mxu0 0.0
    %876 = vmatprep.subr.mxu0 0.0
    %877 = vmatpush1.msra.mxu0 0.0
    %878 = vmatprep.mubr.f32.mxu0 0.0
    %v879 = vand.u32 %v537, 4294901760
    %v880 = vsub.f32 %v537, %v879
    %881 = vmatmul.mubr.f32.gmra.mrb[0].mxu0 %v880
    %v882 = vpop.f32.mrb[0].mxu0
    %v883 = vadd.f32 %v779, %v882
    %v884 = vpop.f32.mrb[0].mxu0
    %885 = vdwg.mxu0
    %886 = vmatprep.subr.mxu0 0.0
    %v887 = vand.u32 %v20, 4294901760
    %888 = vmatpush1.msra.mxu0 %v887
    %889 = vmatprep.subr.mxu0 0.0
    %v890 = vand.u32 %v21, 4294901760
    %891 = vmatpush1.msra.mxu0 %v890
    %892 = vmatprep.subr.mxu0 0.0
    %v893 = vand.u32 %v22, 4294901760
    %894 = vmatpush1.msra.mxu0 %v893
    %895 = vmatprep.subr.mxu0 0.0
    %v896 = vand.u32 %v23, 4294901760
    %897 = vmatpush1.msra.mxu0 %v896
    %898 = vmatprep.subr.mxu0 0.0
    %v899 = vand.u32 %v24, 4294901760
    %900 = vmatpush1.msra.mxu0 %v899
    %901 = vmatprep.subr.mxu0 0.0
    %v902 = vand.u32 %v25, 4294901760
    %903 = vmatpush1.msra.mxu0 %v902
    %904 = vmatprep.subr.mxu0 0.0
    %v905 = vand.u32 %v26, 4294901760
    %906 = vmatpush1.msra.mxu0 %v905
    %907 = vmatprep.subr.mxu0 0.0
    %v908 = vand.u32 %v27, 4294901760
    %909 = vmatpush1.msra.mxu0 %v908
    %910 = vmatprep.subr.mxu0 0.0
    %v911 = vand.u32 %v28, 4294901760
    %912 = vmatpush1.msra.mxu0 %v911
    %913 = vmatprep.subr.mxu0 0.0
    %v914 = vand.u32 %v29, 4294901760
    %915 = vmatpush1.msra.mxu0 %v914
    %916 = vmatprep.subr.mxu0 0.0
    %v917 = vand.u32 %v30, 4294901760
    %918 = vmatpush1.msra.mxu0 %v917
    %919 = vmatprep.subr.mxu0 0.0
    %v920 = vand.u32 %v31, 4294901760
    %921 = vmatpush1.msra.mxu0 %v920
    %922 = vmatprep.subr.mxu0 0.0
    %v923 = vand.u32 %v32, 4294901760
    %924 = vmatpush1.msra.mxu0 %v923
    %925 = vmatprep.subr.mxu0 0.0
    %v926 = vand.u32 %v33, 4294901760
    %927 = vmatpush1.msra.mxu0 %v926
    %928 = vmatprep.subr.mxu0 0.0
    %v929 = vand.u32 %v34, 4294901760
    %930 = vmatpush1.msra.mxu0 %v929
    %931 = vmatprep.subr.mxu0 0.0
    %v932 = vand.u32 %v35, 4294901760
    %933 = vmatpush1.msra.mxu0 %v932
    %934 = vmatprep.subr.mxu0 0.0
    %935 = vmatpush1.msra.mxu0 0.0
    %936 = vmatprep.subr.mxu0 0.0
    %937 = vmatpush1.msra.mxu0 0.0
    %938 = vmatprep.subr.mxu0 0.0
    %939 = vmatpush1.msra.mxu0 0.0
    %940 = vmatprep.subr.mxu0 0.0
    %941 = vmatpush1.msra.mxu0 0.0
    %942 = vmatprep.subr.mxu0 0.0
    %943 = vmatpush1.msra.mxu0 0.0
    %944 = vmatprep.subr.mxu0 0.0
    %945 = vmatpush1.msra.mxu0 0.0
    %946 = vmatprep.subr.mxu0 0.0
    %947 = vmatpush1.msra.mxu0 0.0
    %948 = vmatprep.subr.mxu0 0.0
    %949 = vmatpush1.msra.mxu0 0.0
    %950 = vmatprep.subr.mxu0 0.0
    %951 = vmatpush1.msra.mxu0 0.0
    %952 = vmatprep.subr.mxu0 0.0
    %953 = vmatpush1.msra.mxu0 0.0
    %954 = vmatprep.subr.mxu0 0.0
    %955 = vmatpush1.msra.mxu0 0.0
    %956 = vmatprep.subr.mxu0 0.0
    %957 = vmatpush1.msra.mxu0 0.0
    %958 = vmatprep.subr.mxu0 0.0
    %959 = vmatpush1.msra.mxu0 0.0
    %960 = vmatprep.subr.mxu0 0.0
    %961 = vmatpush1.msra.mxu0 0.0
    %962 = vmatprep.subr.mxu0 0.0
    %963 = vmatpush1.msra.mxu0 0.0
    %964 = vmatprep.subr.mxu0 0.0
    %965 = vmatpush1.msra.mxu0 0.0
    %966 = vmatprep.mubr.f32.mxu0 0.0
    %v967 = vand.u32 %v537, 4294901760
    %v968 = vsub.f32 %v537, %v967
    %v969 = vand.u32 %v968, 4294901760
    %970 = vmatmul.mubr.f32.gmra.mrb[0].mxu0 %v969
    %v971 = vpop.f32.mrb[0].mxu0
    %v972 = vadd.f32 %v883, %v971
    %v973 = vpop.f32.mrb[0].mxu0
    %974 = vdwg.mxu0
    %975 = vmatprep.subr.mxu0 0.0
    %v976 = vand.u32 %v20, 4294901760
    %v977 = vsub.f32 %v20, %v976
    %v978 = vand.u32 %v977, 4294901760
    %979 = vmatpush1.msra.mxu0 %v978
    %980 = vmatprep.subr.mxu0 0.0
    %v981 = vand.u32 %v21, 4294901760
    %v982 = vsub.f32 %v21, %v981
    %v983 = vand.u32 %v982, 4294901760
    %984 = vmatpush1.msra.mxu0 %v983
    %985 = vmatprep.subr.mxu0 0.0
    %v986 = vand.u32 %v22, 4294901760
    %v987 = vsub.f32 %v22, %v986
    %v988 = vand.u32 %v987, 4294901760
    %989 = vmatpush1.msra.mxu0 %v988
    %990 = vmatprep.subr.mxu0 0.0
    %v991 = vand.u32 %v23, 4294901760
    %v992 = vsub.f32 %v23, %v991
    %v993 = vand.u32 %v992, 4294901760
    %994 = vmatpush1.msra.mxu0 %v993
    %995 = vmatprep.subr.mxu0 0.0
    %v996 = vand.u32 %v24, 4294901760
    %v997 = vsub.f32 %v24, %v996
    %v998 = vand.u32 %v997, 4294901760
    %999 = vmatpush1.msra.mxu0 %v998
    %1000 = vmatprep.subr.mxu0 0.0
    %v1001 = vand.u32 %v25, 4294901760
    %v1002 = vsub.f32 %v25, %v1001
    %v1003 = vand.u32 %v1002, 4294901760
    %1004 = vmatpush1.msra.mxu0 %v1003
    %1005 = vmatprep.subr.mxu0 0.0
    %v1006 = vand.u32 %v26, 4294901760
    %v1007 = vsub.f32 %v26, %v1006
    %v1008 = vand.u32 %v1007, 4294901760
    %1009 = vmatpush1.msra.mxu0 %v1008
    %1010 = vmatprep.subr.mxu0 0.0
    %v1011 = vand.u32 %v27, 4294901760
    %v1012 = vsub.f32 %v27, %v1011
    %v1013 = vand.u32 %v1012, 4294901760
    %1014 = vmatpush1.msra.mxu0 %v1013
    %1015 = vmatprep.subr.mxu0 0.0
    %v1016 = vand.u32 %v28, 4294901760
    %v1017 = vsub.f32 %v28, %v1016
    %v1018 = vand.u32 %v1017, 4294901760
    %1019 = vmatpush1.msra.mxu0 %v1018
    %1020 = vmatprep.subr.mxu0 0.0
    %v1021 = vand.u32 %v29, 4294901760
    %v1022 = vsub.f32 %v29, %v1021
    %v1023 = vand.u32 %v1022, 4294901760
    %1024 = vmatpush1.msra.mxu0 %v1023
    %1025 = vmatprep.subr.mxu0 0.0
    %v1026 = vand.u32 %v30, 4294901760
    %v1027 = vsub.f32 %v30, %v1026
    %v1028 = vand.u32 %v1027, 4294901760
    %1029 = vmatpush1.msra.mxu0 %v1028
    %1030 = vmatprep.subr.mxu0 0.0
    %v1031 = vand.u32 %v31, 4294901760
    %v1032 = vsub.f32 %v31, %v1031
    %v1033 = vand.u32 %v1032, 4294901760
    %1034 = vmatpush1.msra.mxu0 %v1033
    %1035 = vmatprep.subr.mxu0 0.0
    %v1036 = vand.u32 %v32, 4294901760
    %v1037 = vsub.f32 %v32, %v1036
    %v1038 = vand.u32 %v1037, 4294901760
    %1039 = vmatpush1.msra.mxu0 %v1038
    %1040 = vmatprep.subr.mxu0 0.0
    %v1041 = vand.u32 %v33, 4294901760
    %v1042 = vsub.f32 %v33, %v1041
    %v1043 = vand.u32 %v1042, 4294901760
    %1044 = vmatpush1.msra.mxu0 %v1043
    %1045 = vmatprep.subr.mxu0 0.0
    %v1046 = vand.u32 %v34, 4294901760
    %v1047 = vsub.f32 %v34, %v1046
    %v1048 = vand.u32 %v1047, 4294901760
    %1049 = vmatpush1.msra.mxu0 %v1048
    %1050 = vmatprep.subr.mxu0 0.0
    %v1051 = vand.u32 %v35, 4294901760
    %v1052 = vsub.f32 %v35, %v1051
    %v1053 = vand.u32 %v1052, 4294901760
    %1054 = vmatpush1.msra.mxu0 %v1053
    %1055 = vmatprep.subr.mxu0 0.0
    %1056 = vmatpush1.msra.mxu0 0.0
    %1057 = vmatprep.subr.mxu0 0.0
    %1058 = vmatpush1.msra.mxu0 0.0
    %1059 = vmatprep.subr.mxu0 0.0
    %1060 = vmatpush1.msra.mxu0 0.0
    %1061 = vmatprep.subr.mxu0 0.0
    %1062 = vmatpush1.msra.mxu0 0.0
    %1063 = vmatprep.subr.mxu0 0.0
    %1064 = vmatpush1.msra.mxu0 0.0
    %1065 = vmatprep.subr.mxu0 0.0
    %1066 = vmatpush1.msra.mxu0 0.0
    %1067 = vmatprep.subr.mxu0 0.0
    %1068 = vmatpush1.msra.mxu0 0.0
    %1069 = vmatprep.subr.mxu0 0.0
    %1070 = vmatpush1.msra.mxu0 0.0
    %1071 = vmatprep.subr.mxu0 0.0
    %1072 = vmatpush1.msra.mxu0 0.0
    %1073 = vmatprep.subr.mxu0 0.0
    %1074 = vmatpush1.msra.mxu0 0.0
    %1075 = vmatprep.subr.mxu0 0.0
    %1076 = vmatpush1.msra.mxu0 0.0
    %1077 = vmatprep.subr.mxu0 0.0
    %1078 = vmatpush1.msra.mxu0 0.0
    %1079 = vmatprep.subr.mxu0 0.0
    %1080 = vmatpush1.msra.mxu0 0.0
    %1081 = vmatprep.subr.mxu0 0.0
    %1082 = vmatpush1.msra.mxu0 0.0
    %1083 = vmatprep.subr.mxu0 0.0
    %1084 = vmatpush1.msra.mxu0 0.0
    %1085 = vmatprep.subr.mxu0 0.0
    %1086 = vmatpush1.msra.mxu0 0.0
    %1087 = vmatprep.mubr.f32.mxu0 0.0
    %v1088 = vand.u32 %v537, 4294901760
    %1089 = vmatmul.mubr.f32.gmra.mrb[0].mxu0 %v1088
    %v1090 = vpop.f32.mrb[0].mxu0
    %v1091 = vadd.f32 %v972, %v1090
    %v1092 = vpop.f32.mrb[0].mxu0
    %1093 = vdwg.mxu0
    %1094 = vmatprep.subr.mxu0 0.0
    %v1095 = vand.u32 %v20, 4294901760
    %1096 = vmatpush1.msra.mxu0 %v1095
    %1097 = vmatprep.subr.mxu0 0.0
    %v1098 = vand.u32 %v21, 4294901760
    %1099 = vmatpush1.msra.mxu0 %v1098
    %1100 = vmatprep.subr.mxu0 0.0
    %v1101 = vand.u32 %v22, 4294901760
    %1102 = vmatpush1.msra.mxu0 %v1101
    %1103 = vmatprep.subr.mxu0 0.0
    %v1104 = vand.u32 %v23, 4294901760
    %1105 = vmatpush1.msra.mxu0 %v1104
    %1106 = vmatprep.subr.mxu0 0.0
    %v1107 = vand.u32 %v24, 4294901760
    %1108 = vmatpush1.msra.mxu0 %v1107
    %1109 = vmatprep.subr.mxu0 0.0
    %v1110 = vand.u32 %v25, 4294901760
    %1111 = vmatpush1.msra.mxu0 %v1110
    %1112 = vmatprep.subr.mxu0 0.0
    %v1113 = vand.u32 %v26, 4294901760
    %1114 = vmatpush1.msra.mxu0 %v1113
    %1115 = vmatprep.subr.mxu0 0.0
    %v1116 = vand.u32 %v27, 4294901760
    %1117 = vmatpush1.msra.mxu0 %v1116
    %1118 = vmatprep.subr.mxu0 0.0
    %v1119 = vand.u32 %v28, 4294901760
    %1120 = vmatpush1.msra.mxu0 %v1119
    %1121 = vmatprep.subr.mxu0 0.0
    %v1122 = vand.u32 %v29, 4294901760
    %1123 = vmatpush1.msra.mxu0 %v1122
    %1124 = vmatprep.subr.mxu0 0.0
    %v1125 = vand.u32 %v30, 4294901760
    %1126 = vmatpush1.msra.mxu0 %v1125
    %1127 = vmatprep.subr.mxu0 0.0
    %v1128 = vand.u32 %v31, 4294901760
    %1129 = vmatpush1.msra.mxu0 %v1128
    %1130 = vmatprep.subr.mxu0 0.0
    %v1131 = vand.u32 %v32, 4294901760
    %1132 = vmatpush1.msra.mxu0 %v1131
    %1133 = vmatprep.subr.mxu0 0.0
    %v1134 = vand.u32 %v33, 4294901760
    %1135 = vmatpush1.msra.mxu0 %v1134
    %1136 = vmatprep.subr.mxu0 0.0
    %v1137 = vand.u32 %v34, 4294901760
    %1138 = vmatpush1.msra.mxu0 %v1137
    %1139 = vmatprep.subr.mxu0 0.0
    %v1140 = vand.u32 %v35, 4294901760
    %1141 = vmatpush1.msra.mxu0 %v1140
    %1142 = vmatprep.subr.mxu0 0.0
    %1143 = vmatpush1.msra.mxu0 0.0
    %1144 = vmatprep.subr.mxu0 0.0
    %1145 = vmatpush1.msra.mxu0 0.0
    %1146 = vmatprep.subr.mxu0 0.0
    %1147 = vmatpush1.msra.mxu0 0.0
    %1148 = vmatprep.subr.mxu0 0.0
    %1149 = vmatpush1.msra.mxu0 0.0
    %1150 = vmatprep.subr.mxu0 0.0
    %1151 = vmatpush1.msra.mxu0 0.0
    %1152 = vmatprep.subr.mxu0 0.0
    %1153 = vmatpush1.msra.mxu0 0.0
    %1154 = vmatprep.subr.mxu0 0.0
    %1155 = vmatpush1.msra.mxu0 0.0
    %1156 = vmatprep.subr.mxu0 0.0
    %1157 = vmatpush1.msra.mxu0 0.0
    %1158 = vmatprep.subr.mxu0 0.0
    %1159 = vmatpush1.msra.mxu0 0.0
    %1160 = vmatprep.subr.mxu0 0.0
    %1161 = vmatpush1.msra.mxu0 0.0
    %1162 = vmatprep.subr.mxu0 0.0
    %1163 = vmatpush1.msra.mxu0 0.0
    %1164 = vmatprep.subr.mxu0 0.0
    %1165 = vmatpush1.msra.mxu0 0.0
    %1166 = vmatprep.subr.mxu0 0.0
    %1167 = vmatpush1.msra.mxu0 0.0
    %1168 = vmatprep.subr.mxu0 0.0
    %1169 = vmatpush1.msra.mxu0 0.0
    %1170 = vmatprep.subr.mxu0 0.0
    %1171 = vmatpush1.msra.mxu0 0.0
    %1172 = vmatprep.subr.mxu0 0.0
    %1173 = vmatpush1.msra.mxu0 0.0
    %1174 = vmatprep.mubr.f32.mxu0 0.0
    %v1175 = vand.u32 %v537, 4294901760
    %1176 = vmatmul.mubr.f32.gmra.mrb[0].mxu0 %v1175
    %v1177 = vpop.f32.mrb[0].mxu0
    %v1178 = vadd.f32 %v1091, %v1177
    %v1179 = vpop.f32.mrb[0].mxu0
    %1180 = vdwg.mxu0
    %1181 = vmatprep.subr.mxu0 0.0
    %v1182 = vand.u32 %v20, 4294901760
    %1183 = vmatpush1.msra.mxu0 %v1182
    %1184 = vmatprep.subr.mxu0 0.0
    %v1185 = vand.u32 %v21, 4294901760
    %1186 = vmatpush1.msra.mxu0 %v1185
    %1187 = vmatprep.subr.mxu0 0.0
    %v1188 = vand.u32 %v22, 4294901760
    %1189 = vmatpush1.msra.mxu0 %v1188
    %1190 = vmatprep.subr.mxu0 0.0
    %v1191 = vand.u32 %v23, 4294901760
    %1192 = vmatpush1.msra.mxu0 %v1191
    %1193 = vmatprep.subr.mxu0 0.0
    %v1194 = vand.u32 %v24, 4294901760
    %1195 = vmatpush1.msra.mxu0 %v1194
    %1196 = vmatprep.subr.mxu0 0.0
    %v1197 = vand.u32 %v25, 4294901760
    %1198 = vmatpush1.msra.mxu0 %v1197
    %1199 = vmatprep.subr.mxu0 0.0
    %v1200 = vand.u32 %v26, 4294901760
    %1201 = vmatpush1.msra.mxu0 %v1200
    %1202 = vmatprep.subr.mxu0 0.0
    %v1203 = vand.u32 %v27, 4294901760
    %1204 = vmatpush1.msra.mxu0 %v1203
    %1205 = vmatprep.subr.mxu0 0.0
    %v1206 = vand.u32 %v28, 4294901760
    %1207 = vmatpush1.msra.mxu0 %v1206
    %1208 = vmatprep.subr.mxu0 0.0
    %v1209 = vand.u32 %v29, 4294901760
    %1210 = vmatpush1.msra.mxu0 %v1209
    %1211 = vmatprep.subr.mxu0 0.0
    %v1212 = vand.u32 %v30, 4294901760
    %1213 = vmatpush1.msra.mxu0 %v1212
    %1214 = vmatprep.subr.mxu0 0.0
    %v1215 = vand.u32 %v31, 4294901760
    %1216 = vmatpush1.msra.mxu0 %v1215
    %1217 = vmatprep.subr.mxu0 0.0
    %v1218 = vand.u32 %v32, 4294901760
    %1219 = vmatpush1.msra.mxu0 %v1218
    %1220 = vmatprep.subr.mxu0 0.0
    %v1221 = vand.u32 %v33, 4294901760
    %1222 = vmatpush1.msra.mxu0 %v1221
    %1223 = vmatprep.subr.mxu0 0.0
    %v1224 = vand.u32 %v34, 4294901760
    %1225 = vmatpush1.msra.mxu0 %v1224
    %1226 = vmatprep.subr.mxu0 0.0
    %v1227 = vand.u32 %v35, 4294901760
    %1228 = vmatpush1.msra.mxu0 %v1227
    %1229 = vmatprep.subr.mxu0 0.0
    %1230 = vmatpush1.msra.mxu0 0.0
    %1231 = vmatprep.subr.mxu0 0.0
    %1232 = vmatpush1.msra.mxu0 0.0
    %1233 = vmatprep.subr.mxu0 0.0
    %1234 = vmatpush1.msra.mxu0 0.0
    %1235 = vmatprep.subr.mxu0 0.0
    %1236 = vmatpush1.msra.mxu0 0.0
    %1237 = vmatprep.subr.mxu0 0.0
    %1238 = vmatpush1.msra.mxu0 0.0
    %1239 = vmatprep.subr.mxu0 0.0
    %1240 = vmatpush1.msra.mxu0 0.0
    %1241 = vmatprep.subr.mxu0 0.0
    %1242 = vmatpush1.msra.mxu0 0.0
    %1243 = vmatprep.subr.mxu0 0.0
    %1244 = vmatpush1.msra.mxu0 0.0
    %1245 = vmatprep.subr.mxu0 0.0
    %1246 = vmatpush1.msra.mxu0 0.0
    %1247 = vmatprep.subr.mxu0 0.0
    %1248 = vmatpush1.msra.mxu0 0.0
    %1249 = vmatprep.subr.mxu0 0.0
    %1250 = vmatpush1.msra.mxu0 0.0
    %1251 = vmatprep.subr.mxu0 0.0
    %1252 = vmatpush1.msra.mxu0 0.0
    %1253 = vmatprep.subr.mxu0 0.0
    %1254 = vmatpush1.msra.mxu0 0.0
    %1255 = vmatprep.subr.mxu0 0.0
    %1256 = vmatpush1.msra.mxu0 0.0
    %1257 = vmatprep.subr.mxu0 0.0
    %1258 = vmatpush1.msra.mxu0 0.0
    %1259 = vmatprep.subr.mxu0 0.0
    %1260 = vmatpush1.msra.mxu0 0.0
    %1261 = vmatprep.mubr.f32.mxu0 0.0
    %v1262 = vand.u32 %v539, 4294901760
    %v1263 = vsub.f32 %v539, %v1262
    %v1264 = vand.u32 %v1263, 4294901760
    %v1265 = vsub.f32 %v1263, %v1264
    %v1266 = vand.u32 %v1265, 4294901760
    %1267 = vmatmul.mubr.f32.gmra.mrb[0].mxu0 %v1266
    %v1268 = vpop.f32.mrb[0].mxu0
    %v1269 = vadd.f32 0.0, %v1268
    %v1270 = vpop.f32.mrb[0].mxu0
    %1271 = vdwg.mxu0
    %1272 = vmatprep.subr.mxu0 0.0
    %v1273 = vand.u32 %v20, 4294901760
    %v1274 = vsub.f32 %v20, %v1273
    %v1275 = vand.u32 %v1274, 4294901760
    %v1276 = vsub.f32 %v1274, %v1275
    %v1277 = vand.u32 %v1276, 4294901760
    %1278 = vmatpush1.msra.mxu0 %v1277
    %1279 = vmatprep.subr.mxu0 0.0
    %v1280 = vand.u32 %v21, 4294901760
    %v1281 = vsub.f32 %v21, %v1280
    %v1282 = vand.u32 %v1281, 4294901760
    %v1283 = vsub.f32 %v1281, %v1282
    %v1284 = vand.u32 %v1283, 4294901760
    %1285 = vmatpush1.msra.mxu0 %v1284
    %1286 = vmatprep.subr.mxu0 0.0
    %v1287 = vand.u32 %v22, 4294901760
    %v1288 = vsub.f32 %v22, %v1287
    %v1289 = vand.u32 %v1288, 4294901760
    %v1290 = vsub.f32 %v1288, %v1289
    %v1291 = vand.u32 %v1290, 4294901760
    %1292 = vmatpush1.msra.mxu0 %v1291
    %1293 = vmatprep.subr.mxu0 0.0
    %v1294 = vand.u32 %v23, 4294901760
    %v1295 = vsub.f32 %v23, %v1294
    %v1296 = vand.u32 %v1295, 4294901760
    %v1297 = vsub.f32 %v1295, %v1296
    %v1298 = vand.u32 %v1297, 4294901760
    %1299 = vmatpush1.msra.mxu0 %v1298
    %1300 = vmatprep.subr.mxu0 0.0
    %v1301 = vand.u32 %v24, 4294901760
    %v1302 = vsub.f32 %v24, %v1301
    %v1303 = vand.u32 %v1302, 4294901760
    %v1304 = vsub.f32 %v1302, %v1303
    %v1305 = vand.u32 %v1304, 4294901760
    %1306 = vmatpush1.msra.mxu0 %v1305
    %1307 = vmatprep.subr.mxu0 0.0
    %v1308 = vand.u32 %v25, 4294901760
    %v1309 = vsub.f32 %v25, %v1308
    %v1310 = vand.u32 %v1309, 4294901760
    %v1311 = vsub.f32 %v1309, %v1310
    %v1312 = vand.u32 %v1311, 4294901760
    %1313 = vmatpush1.msra.mxu0 %v1312
    %1314 = vmatprep.subr.mxu0 0.0
    %v1315 = vand.u32 %v26, 4294901760
    %v1316 = vsub.f32 %v26, %v1315
    %v1317 = vand.u32 %v1316, 4294901760
    %v1318 = vsub.f32 %v1316, %v1317
    %v1319 = vand.u32 %v1318, 4294901760
    %1320 = vmatpush1.msra.mxu0 %v1319
    %1321 = vmatprep.subr.mxu0 0.0
    %v1322 = vand.u32 %v27, 4294901760
    %v1323 = vsub.f32 %v27, %v1322
    %v1324 = vand.u32 %v1323, 4294901760
    %v1325 = vsub.f32 %v1323, %v1324
    %v1326 = vand.u32 %v1325, 4294901760
    %1327 = vmatpush1.msra.mxu0 %v1326
    %1328 = vmatprep.subr.mxu0 0.0
    %v1329 = vand.u32 %v28, 4294901760
    %v1330 = vsub.f32 %v28, %v1329
    %v1331 = vand.u32 %v1330, 4294901760
    %v1332 = vsub.f32 %v1330, %v1331
    %v1333 = vand.u32 %v1332, 4294901760
    %1334 = vmatpush1.msra.mxu0 %v1333
    %1335 = vmatprep.subr.mxu0 0.0
    %v1336 = vand.u32 %v29, 4294901760
    %v1337 = vsub.f32 %v29, %v1336
    %v1338 = vand.u32 %v1337, 4294901760
    %v1339 = vsub.f32 %v1337, %v1338
    %v1340 = vand.u32 %v1339, 4294901760
    %1341 = vmatpush1.msra.mxu0 %v1340
    %1342 = vmatprep.subr.mxu0 0.0
    %v1343 = vand.u32 %v30, 4294901760
    %v1344 = vsub.f32 %v30, %v1343
    %v1345 = vand.u32 %v1344, 4294901760
    %v1346 = vsub.f32 %v1344, %v1345
    %v1347 = vand.u32 %v1346, 4294901760
    %1348 = vmatpush1.msra.mxu0 %v1347
    %1349 = vmatprep.subr.mxu0 0.0
    %v1350 = vand.u32 %v31, 4294901760
    %v1351 = vsub.f32 %v31, %v1350
    %v1352 = vand.u32 %v1351, 4294901760
    %v1353 = vsub.f32 %v1351, %v1352
    %v1354 = vand.u32 %v1353, 4294901760
    %1355 = vmatpush1.msra.mxu0 %v1354
    %1356 = vmatprep.subr.mxu0 0.0
    %v1357 = vand.u32 %v32, 4294901760
    %v1358 = vsub.f32 %v32, %v1357
    %v1359 = vand.u32 %v1358, 4294901760
    %v1360 = vsub.f32 %v1358, %v1359
    %v1361 = vand.u32 %v1360, 4294901760
    %1362 = vmatpush1.msra.mxu0 %v1361
    %1363 = vmatprep.subr.mxu0 0.0
    %v1364 = vand.u32 %v33, 4294901760
    %v1365 = vsub.f32 %v33, %v1364
    %v1366 = vand.u32 %v1365, 4294901760
    %v1367 = vsub.f32 %v1365, %v1366
    %v1368 = vand.u32 %v1367, 4294901760
    %1369 = vmatpush1.msra.mxu0 %v1368
    %1370 = vmatprep.subr.mxu0 0.0
    %v1371 = vand.u32 %v34, 4294901760
    %v1372 = vsub.f32 %v34, %v1371
    %v1373 = vand.u32 %v1372, 4294901760
    %v1374 = vsub.f32 %v1372, %v1373
    %v1375 = vand.u32 %v1374, 4294901760
    %1376 = vmatpush1.msra.mxu0 %v1375
    %1377 = vmatprep.subr.mxu0 0.0
    %v1378 = vand.u32 %v35, 4294901760
    %v1379 = vsub.f32 %v35, %v1378
    %v1380 = vand.u32 %v1379, 4294901760
    %v1381 = vsub.f32 %v1379, %v1380
    %v1382 = vand.u32 %v1381, 4294901760
    %1383 = vmatpush1.msra.mxu0 %v1382
    %1384 = vmatprep.subr.mxu0 0.0
    %1385 = vmatpush1.msra.mxu0 0.0
    %1386 = vmatprep.subr.mxu0 0.0
    %1387 = vmatpush1.msra.mxu0 0.0
    %1388 = vmatprep.subr.mxu0 0.0
    %1389 = vmatpush1.msra.mxu0 0.0
    %1390 = vmatprep.subr.mxu0 0.0
    %1391 = vmatpush1.msra.mxu0 0.0
    %1392 = vmatprep.subr.mxu0 0.0
    %1393 = vmatpush1.msra.mxu0 0.0
    %1394 = vmatprep.subr.mxu0 0.0
    %1395 = vmatpush1.msra.mxu0 0.0
    %1396 = vmatprep.subr.mxu0 0.0
    %1397 = vmatpush1.msra.mxu0 0.0
    %1398 = vmatprep.subr.mxu0 0.0
    %1399 = vmatpush1.msra.mxu0 0.0
    %1400 = vmatprep.subr.mxu0 0.0
    %1401 = vmatpush1.msra.mxu0 0.0
    %1402 = vmatprep.subr.mxu0 0.0
    %1403 = vmatpush1.msra.mxu0 0.0
    %1404 = vmatprep.subr.mxu0 0.0
    %1405 = vmatpush1.msra.mxu0 0.0
    %1406 = vmatprep.subr.mxu0 0.0
    %1407 = vmatpush1.msra.mxu0 0.0
    %1408 = vmatprep.subr.mxu0 0.0
    %1409 = vmatpush1.msra.mxu0 0.0
    %1410 = vmatprep.subr.mxu0 0.0
    %1411 = vmatpush1.msra.mxu0 0.0
    %1412 = vmatprep.subr.mxu0 0.0
    %1413 = vmatpush1.msra.mxu0 0.0
    %1414 = vmatprep.subr.mxu0 0.0
    %1415 = vmatpush1.msra.mxu0 0.0
    %1416 = vmatprep.mubr.f32.mxu0 0.0
    %v1417 = vand.u32 %v539, 4294901760
    %1418 = vmatmul.mubr.f32.gmra.mrb[0].mxu0 %v1417
    %v1419 = vpop.f32.mrb[0].mxu0
    %v1420 = vadd.f32 %v1269, %v1419
    %v1421 = vpop.f32.mrb[0].mxu0
    %1422 = vdwg.mxu0
    %1423 = vmatprep.subr.mxu0 0.0
    %v1424 = vand.u32 %v20, 4294901760
    %v1425 = vsub.f32 %v20, %v1424
    %1426 = vmatpush1.msra.mxu0 %v1425
    %1427 = vmatprep.subr.mxu0 0.0
    %v1428 = vand.u32 %v21, 4294901760
    %v1429 = vsub.f32 %v21, %v1428
    %1430 = vmatpush1.msra.mxu0 %v1429
    %1431 = vmatprep.subr.mxu0 0.0
    %v1432 = vand.u32 %v22, 4294901760
    %v1433 = vsub.f32 %v22, %v1432
    %1434 = vmatpush1.msra.mxu0 %v1433
    %1435 = vmatprep.subr.mxu0 0.0
    %v1436 = vand.u32 %v23, 4294901760
    %v1437 = vsub.f32 %v23, %v1436
    %1438 = vmatpush1.msra.mxu0 %v1437
    %1439 = vmatprep.subr.mxu0 0.0
    %v1440 = vand.u32 %v24, 4294901760
    %v1441 = vsub.f32 %v24, %v1440
    %1442 = vmatpush1.msra.mxu0 %v1441
    %1443 = vmatprep.subr.mxu0 0.0
    %v1444 = vand.u32 %v25, 4294901760
    %v1445 = vsub.f32 %v25, %v1444
    %1446 = vmatpush1.msra.mxu0 %v1445
    %1447 = vmatprep.subr.mxu0 0.0
    %v1448 = vand.u32 %v26, 4294901760
    %v1449 = vsub.f32 %v26, %v1448
    %1450 = vmatpush1.msra.mxu0 %v1449
    %1451 = vmatprep.subr.mxu0 0.0
    %v1452 = vand.u32 %v27, 4294901760
    %v1453 = vsub.f32 %v27, %v1452
    %1454 = vmatpush1.msra.mxu0 %v1453
    %1455 = vmatprep.subr.mxu0 0.0
    %v1456 = vand.u32 %v28, 4294901760
    %v1457 = vsub.f32 %v28, %v1456
    %1458 = vmatpush1.msra.mxu0 %v1457
    %1459 = vmatprep.subr.mxu0 0.0
    %v1460 = vand.u32 %v29, 4294901760
    %v1461 = vsub.f32 %v29, %v1460
    %1462 = vmatpush1.msra.mxu0 %v1461
    %1463 = vmatprep.subr.mxu0 0.0
    %v1464 = vand.u32 %v30, 4294901760
    %v1465 = vsub.f32 %v30, %v1464
    %1466 = vmatpush1.msra.mxu0 %v1465
    %1467 = vmatprep.subr.mxu0 0.0
    %v1468 = vand.u32 %v31, 4294901760
    %v1469 = vsub.f32 %v31, %v1468
    %1470 = vmatpush1.msra.mxu0 %v1469
    %1471 = vmatprep.subr.mxu0 0.0
    %v1472 = vand.u32 %v32, 4294901760
    %v1473 = vsub.f32 %v32, %v1472
    %1474 = vmatpush1.msra.mxu0 %v1473
    %1475 = vmatprep.subr.mxu0 0.0
    %v1476 = vand.u32 %v33, 4294901760
    %v1477 = vsub.f32 %v33, %v1476
    %1478 = vmatpush1.msra.mxu0 %v1477
    %1479 = vmatprep.subr.mxu0 0.0
    %v1480 = vand.u32 %v34, 4294901760
    %v1481 = vsub.f32 %v34, %v1480
    %1482 = vmatpush1.msra.mxu0 %v1481
    %1483 = vmatprep.subr.mxu0 0.0
    %v1484 = vand.u32 %v35, 4294901760
    %v1485 = vsub.f32 %v35, %v1484
    %1486 = vmatpush1.msra.mxu0 %v1485
    %1487 = vmatprep.subr.mxu0 0.0
    %1488 = vmatpush1.msra.mxu0 0.0
    %1489 = vmatprep.subr.mxu0 0.0
    %1490 = vmatpush1.msra.mxu0 0.0
    %1491 = vmatprep.subr.mxu0 0.0
    %1492 = vmatpush1.msra.mxu0 0.0
    %1493 = vmatprep.subr.mxu0 0.0
    %1494 = vmatpush1.msra.mxu0 0.0
    %1495 = vmatprep.subr.mxu0 0.0
    %1496 = vmatpush1.msra.mxu0 0.0
    %1497 = vmatprep.subr.mxu0 0.0
    %1498 = vmatpush1.msra.mxu0 0.0
    %1499 = vmatprep.subr.mxu0 0.0
    %1500 = vmatpush1.msra.mxu0 0.0
    %1501 = vmatprep.subr.mxu0 0.0
    %1502 = vmatpush1.msra.mxu0 0.0
    %1503 = vmatprep.subr.mxu0 0.0
    %1504 = vmatpush1.msra.mxu0 0.0
    %1505 = vmatprep.subr.mxu0 0.0
    %1506 = vmatpush1.msra.mxu0 0.0
    %1507 = vmatprep.subr.mxu0 0.0
    %1508 = vmatpush1.msra.mxu0 0.0
    %1509 = vmatprep.subr.mxu0 0.0
    %1510 = vmatpush1.msra.mxu0 0.0
    %1511 = vmatprep.subr.mxu0 0.0
    %1512 = vmatpush1.msra.mxu0 0.0
    %1513 = vmatprep.subr.mxu0 0.0
    %1514 = vmatpush1.msra.mxu0 0.0
    %1515 = vmatprep.subr.mxu0 0.0
    %1516 = vmatpush1.msra.mxu0 0.0
    %1517 = vmatprep.subr.mxu0 0.0
    %1518 = vmatpush1.msra.mxu0 0.0
    %1519 = vmatprep.mubr.f32.mxu0 0.0
    %v1520 = vand.u32 %v539, 4294901760
    %v1521 = vsub.f32 %v539, %v1520
    %1522 = vmatmul.mubr.f32.gmra.mrb[0].mxu0 %v1521
    %v1523 = vpop.f32.mrb[0].mxu0
    %v1524 = vadd.f32 %v1420, %v1523
    %v1525 = vpop.f32.mrb[0].mxu0
    %1526 = vdwg.mxu0
    %1527 = vmatprep.subr.mxu0 0.0
    %v1528 = vand.u32 %v20, 4294901760
    %1529 = vmatpush1.msra.mxu0 %v1528
    %1530 = vmatprep.subr.mxu0 0.0
    %v1531 = vand.u32 %v21, 4294901760
    %1532 = vmatpush1.msra.mxu0 %v1531
    %1533 = vmatprep.subr.mxu0 0.0
    %v1534 = vand.u32 %v22, 4294901760
    %1535 = vmatpush1.msra.mxu0 %v1534
    %1536 = vmatprep.subr.mxu0 0.0
    %v1537 = vand.u32 %v23, 4294901760
    %1538 = vmatpush1.msra.mxu0 %v1537
    %1539 = vmatprep.subr.mxu0 0.0
    %v1540 = vand.u32 %v24, 4294901760
    %1541 = vmatpush1.msra.mxu0 %v1540
    %1542 = vmatprep.subr.mxu0 0.0
    %v1543 = vand.u32 %v25, 4294901760
    %1544 = vmatpush1.msra.mxu0 %v1543
    %1545 = vmatprep.subr.mxu0 0.0
    %v1546 = vand.u32 %v26, 4294901760
    %1547 = vmatpush1.msra.mxu0 %v1546
    %1548 = vmatprep.subr.mxu0 0.0
    %v1549 = vand.u32 %v27, 4294901760
    %1550 = vmatpush1.msra.mxu0 %v1549
    %1551 = vmatprep.subr.mxu0 0.0
    %v1552 = vand.u32 %v28, 4294901760
    %1553 = vmatpush1.msra.mxu0 %v1552
    %1554 = vmatprep.subr.mxu0 0.0
    %v1555 = vand.u32 %v29, 4294901760
    %1556 = vmatpush1.msra.mxu0 %v1555
    %1557 = vmatprep.subr.mxu0 0.0
    %v1558 = vand.u32 %v30, 4294901760
    %1559 = vmatpush1.msra.mxu0 %v1558
    %1560 = vmatprep.subr.mxu0 0.0
    %v1561 = vand.u32 %v31, 4294901760
    %1562 = vmatpush1.msra.mxu0 %v1561
    %1563 = vmatprep.subr.mxu0 0.0
    %v1564 = vand.u32 %v32, 4294901760
    %1565 = vmatpush1.msra.mxu0 %v1564
    %1566 = vmatprep.subr.mxu0 0.0
    %v1567 = vand.u32 %v33, 4294901760
    %1568 = vmatpush1.msra.mxu0 %v1567
    %1569 = vmatprep.subr.mxu0 0.0
    %v1570 = vand.u32 %v34, 4294901760
    %1571 = vmatpush1.msra.mxu0 %v1570
    %1572 = vmatprep.subr.mxu0 0.0
    %v1573 = vand.u32 %v35, 4294901760
    %1574 = vmatpush1.msra.mxu0 %v1573
    %1575 = vmatprep.subr.mxu0 0.0
    %1576 = vmatpush1.msra.mxu0 0.0
    %1577 = vmatprep.subr.mxu0 0.0
    %1578 = vmatpush1.msra.mxu0 0.0
    %1579 = vmatprep.subr.mxu0 0.0
    %1580 = vmatpush1.msra.mxu0 0.0
    %1581 = vmatprep.subr.mxu0 0.0
    %1582 = vmatpush1.msra.mxu0 0.0
    %1583 = vmatprep.subr.mxu0 0.0
    %1584 = vmatpush1.msra.mxu0 0.0
    %1585 = vmatprep.subr.mxu0 0.0
    %1586 = vmatpush1.msra.mxu0 0.0
    %1587 = vmatprep.subr.mxu0 0.0
    %1588 = vmatpush1.msra.mxu0 0.0
    %1589 = vmatprep.subr.mxu0 0.0
    %1590 = vmatpush1.msra.mxu0 0.0
    %1591 = vmatprep.subr.mxu0 0.0
    %1592 = vmatpush1.msra.mxu0 0.0
    %1593 = vmatprep.subr.mxu0 0.0
    %1594 = vmatpush1.msra.mxu0 0.0
    %1595 = vmatprep.subr.mxu0 0.0
    %1596 = vmatpush1.msra.mxu0 0.0
    %1597 = vmatprep.subr.mxu0 0.0
    %1598 = vmatpush1.msra.mxu0 0.0
    %1599 = vmatprep.subr.mxu0 0.0
    %1600 = vmatpush1.msra.mxu0 0.0
    %1601 = vmatprep.subr.mxu0 0.0
    %1602 = vmatpush1.msra.mxu0 0.0
    %1603 = vmatprep.subr.mxu0 0.0
    %1604 = vmatpush1.msra.mxu0 0.0
    %1605 = vmatprep.subr.mxu0 0.0
    %1606 = vmatpush1.msra.mxu0 0.0
    %1607 = vmatprep.mubr.f32.mxu0 0.0
    %v1608 = vand.u32 %v539, 4294901760
    %v1609 = vsub.f32 %v539, %v1608
    %v1610 = vand.u32 %v1609, 4294901760
    %1611 = vmatmul.mubr.f32.gmra.mrb[0].mxu0 %v1610
    %v1612 = vpop.f32.mrb[0].mxu0
    %v1613 = vadd.f32 %v1524, %v1612
    %v1614 = vpop.f32.mrb[0].mxu0
    %1615 = vdwg.mxu0
    %1616 = vmatprep.subr.mxu0 0.0
    %v1617 = vand.u32 %v20, 4294901760
    %v1618 = vsub.f32 %v20, %v1617
    %v1619 = vand.u32 %v1618, 4294901760
    %1620 = vmatpush1.msra.mxu0 %v1619
    %1621 = vmatprep.subr.mxu0 0.0
    %v1622 = vand.u32 %v21, 4294901760
    %v1623 = vsub.f32 %v21, %v1622
    %v1624 = vand.u32 %v1623, 4294901760
    %1625 = vmatpush1.msra.mxu0 %v1624
    %1626 = vmatprep.subr.mxu0 0.0
    %v1627 = vand.u32 %v22, 4294901760
    %v1628 = vsub.f32 %v22, %v1627
    %v1629 = vand.u32 %v1628, 4294901760
    %1630 = vmatpush1.msra.mxu0 %v1629
    %1631 = vmatprep.subr.mxu0 0.0
    %v1632 = vand.u32 %v23, 4294901760
    %v1633 = vsub.f32 %v23, %v1632
    %v1634 = vand.u32 %v1633, 4294901760
    %1635 = vmatpush1.msra.mxu0 %v1634
    %1636 = vmatprep.subr.mxu0 0.0
    %v1637 = vand.u32 %v24, 4294901760
    %v1638 = vsub.f32 %v24, %v1637
    %v1639 = vand.u32 %v1638, 4294901760
    %1640 = vmatpush1.msra.mxu0 %v1639
    %1641 = vmatprep.subr.mxu0 0.0
    %v1642 = vand.u32 %v25, 4294901760
    %v1643 = vsub.f32 %v25, %v1642
    %v1644 = vand.u32 %v1643, 4294901760
    %1645 = vmatpush1.msra.mxu0 %v1644
    %1646 = vmatprep.subr.mxu0 0.0
    %v1647 = vand.u32 %v26, 4294901760
    %v1648 = vsub.f32 %v26, %v1647
    %v1649 = vand.u32 %v1648, 4294901760
    %1650 = vmatpush1.msra.mxu0 %v1649
    %1651 = vmatprep.subr.mxu0 0.0
    %v1652 = vand.u32 %v27, 4294901760
    %v1653 = vsub.f32 %v27, %v1652
    %v1654 = vand.u32 %v1653, 4294901760
    %1655 = vmatpush1.msra.mxu0 %v1654
    %1656 = vmatprep.subr.mxu0 0.0
    %v1657 = vand.u32 %v28, 4294901760
    %v1658 = vsub.f32 %v28, %v1657
    %v1659 = vand.u32 %v1658, 4294901760
    %1660 = vmatpush1.msra.mxu0 %v1659
    %1661 = vmatprep.subr.mxu0 0.0
    %v1662 = vand.u32 %v29, 4294901760
    %v1663 = vsub.f32 %v29, %v1662
    %v1664 = vand.u32 %v1663, 4294901760
    %1665 = vmatpush1.msra.mxu0 %v1664
    %1666 = vmatprep.subr.mxu0 0.0
    %v1667 = vand.u32 %v30, 4294901760
    %v1668 = vsub.f32 %v30, %v1667
    %v1669 = vand.u32 %v1668, 4294901760
    %1670 = vmatpush1.msra.mxu0 %v1669
    %1671 = vmatprep.subr.mxu0 0.0
    %v1672 = vand.u32 %v31, 4294901760
    %v1673 = vsub.f32 %v31, %v1672
    %v1674 = vand.u32 %v1673, 4294901760
    %1675 = vmatpush1.msra.mxu0 %v1674
    %1676 = vmatprep.subr.mxu0 0.0
    %v1677 = vand.u32 %v32, 4294901760
    %v1678 = vsub.f32 %v32, %v1677
    %v1679 = vand.u32 %v1678, 4294901760
    %1680 = vmatpush1.msra.mxu0 %v1679
    %1681 = vmatprep.subr.mxu0 0.0
    %v1682 = vand.u32 %v33, 4294901760
    %v1683 = vsub.f32 %v33, %v1682
    %v1684 = vand.u32 %v1683, 4294901760
    %1685 = vmatpush1.msra.mxu0 %v1684
    %1686 = vmatprep.subr.mxu0 0.0
    %v1687 = vand.u32 %v34, 4294901760
    %v1688 = vsub.f32 %v34, %v1687
    %v1689 = vand.u32 %v1688, 4294901760
    %1690 = vmatpush1.msra.mxu0 %v1689
    %1691 = vmatprep.subr.mxu0 0.0
    %v1692 = vand.u32 %v35, 4294901760
    %v1693 = vsub.f32 %v35, %v1692
    %v1694 = vand.u32 %v1693, 4294901760
    %1695 = vmatpush1.msra.mxu0 %v1694
    %1696 = vmatprep.subr.mxu0 0.0
    %1697 = vmatpush1.msra.mxu0 0.0
    %1698 = vmatprep.subr.mxu0 0.0
    %1699 = vmatpush1.msra.mxu0 0.0
    %1700 = vmatprep.subr.mxu0 0.0
    %1701 = vmatpush1.msra.mxu0 0.0
    %1702 = vmatprep.subr.mxu0 0.0
    %1703 = vmatpush1.msra.mxu0 0.0
    %1704 = vmatprep.subr.mxu0 0.0
    %1705 = vmatpush1.msra.mxu0 0.0
    %1706 = vmatprep.subr.mxu0 0.0
    %1707 = vmatpush1.msra.mxu0 0.0
    %1708 = vmatprep.subr.mxu0 0.0
    %1709 = vmatpush1.msra.mxu0 0.0
    %1710 = vmatprep.subr.mxu0 0.0
    %1711 = vmatpush1.msra.mxu0 0.0
    %1712 = vmatprep.subr.mxu0 0.0
    %1713 = vmatpush1.msra.mxu0 0.0
    %1714 = vmatprep.subr.mxu0 0.0
    %1715 = vmatpush1.msra.mxu0 0.0
    %1716 = vmatprep.subr.mxu0 0.0
    %1717 = vmatpush1.msra.mxu0 0.0
    %1718 = vmatprep.subr.mxu0 0.0
    %1719 = vmatpush1.msra.mxu0 0.0
    %1720 = vmatprep.subr.mxu0 0.0
    %1721 = vmatpush1.msra.mxu0 0.0
    %1722 = vmatprep.subr.mxu0 0.0
    %1723 = vmatpush1.msra.mxu0 0.0
    %1724 = vmatprep.subr.mxu0 0.0
    %1725 = vmatpush1.msra.mxu0 0.0
    %1726 = vmatprep.subr.mxu0 0.0
    %1727 = vmatpush1.msra.mxu0 0.0
    %1728 = vmatprep.mubr.f32.mxu0 0.0
    %v1729 = vand.u32 %v539, 4294901760
    %1730 = vmatmul.mubr.f32.gmra.mrb[0].mxu0 %v1729
    %v1731 = vpop.f32.mrb[0].mxu0
    %v1732 = vadd.f32 %v1613, %v1731
    %v1733 = vpop.f32.mrb[0].mxu0
    %1734 = vdwg.mxu0
    %1735 = vmatprep.subr.mxu0 0.0
    %v1736 = vand.u32 %v20, 4294901760
    %1737 = vmatpush1.msra.mxu0 %v1736
    %1738 = vmatprep.subr.mxu0 0.0
    %v1739 = vand.u32 %v21, 4294901760
    %1740 = vmatpush1.msra.mxu0 %v1739
    %1741 = vmatprep.subr.mxu0 0.0
    %v1742 = vand.u32 %v22, 4294901760
    %1743 = vmatpush1.msra.mxu0 %v1742
    %1744 = vmatprep.subr.mxu0 0.0
    %v1745 = vand.u32 %v23, 4294901760
    %1746 = vmatpush1.msra.mxu0 %v1745
    %1747 = vmatprep.subr.mxu0 0.0
    %v1748 = vand.u32 %v24, 4294901760
    %1749 = vmatpush1.msra.mxu0 %v1748
    %1750 = vmatprep.subr.mxu0 0.0
    %v1751 = vand.u32 %v25, 4294901760
    %1752 = vmatpush1.msra.mxu0 %v1751
    %1753 = vmatprep.subr.mxu0 0.0
    %v1754 = vand.u32 %v26, 4294901760
    %1755 = vmatpush1.msra.mxu0 %v1754
    %1756 = vmatprep.subr.mxu0 0.0
    %v1757 = vand.u32 %v27, 4294901760
    %1758 = vmatpush1.msra.mxu0 %v1757
    %1759 = vmatprep.subr.mxu0 0.0
    %v1760 = vand.u32 %v28, 4294901760
    %1761 = vmatpush1.msra.mxu0 %v1760
    %1762 = vmatprep.subr.mxu0 0.0
    %v1763 = vand.u32 %v29, 4294901760
    %1764 = vmatpush1.msra.mxu0 %v1763
    %1765 = vmatprep.subr.mxu0 0.0
    %v1766 = vand.u32 %v30, 4294901760
    %1767 = vmatpush1.msra.mxu0 %v1766
    %1768 = vmatprep.subr.mxu0 0.0
    %v1769 = vand.u32 %v31, 4294901760
    %1770 = vmatpush1.msra.mxu0 %v1769
    %1771 = vmatprep.subr.mxu0 0.0
    %v1772 = vand.u32 %v32, 4294901760
    %1773 = vmatpush1.msra.mxu0 %v1772
    %1774 = vmatprep.subr.mxu0 0.0
    %v1775 = vand.u32 %v33, 4294901760
    %1776 = vmatpush1.msra.mxu0 %v1775
    %1777 = vmatprep.subr.mxu0 0.0
    %v1778 = vand.u32 %v34, 4294901760
    %1779 = vmatpush1.msra.mxu0 %v1778
    %1780 = vmatprep.subr.mxu0 0.0
    %v1781 = vand.u32 %v35, 4294901760
    %1782 = vmatpush1.msra.mxu0 %v1781
    %1783 = vmatprep.subr.mxu0 0.0
    %1784 = vmatpush1.msra.mxu0 0.0
    %1785 = vmatprep.subr.mxu0 0.0
    %1786 = vmatpush1.msra.mxu0 0.0
    %1787 = vmatprep.subr.mxu0 0.0
    %1788 = vmatpush1.msra.mxu0 0.0
    %1789 = vmatprep.subr.mxu0 0.0
    %1790 = vmatpush1.msra.mxu0 0.0
    %1791 = vmatprep.subr.mxu0 0.0
    %1792 = vmatpush1.msra.mxu0 0.0
    %1793 = vmatprep.subr.mxu0 0.0
    %1794 = vmatpush1.msra.mxu0 0.0
    %1795 = vmatprep.subr.mxu0 0.0
    %1796 = vmatpush1.msra.mxu0 0.0
    %1797 = vmatprep.subr.mxu0 0.0
    %1798 = vmatpush1.msra.mxu0 0.0
    %1799 = vmatprep.subr.mxu0 0.0
    %1800 = vmatpush1.msra.mxu0 0.0
    %1801 = vmatprep.subr.mxu0 0.0
    %1802 = vmatpush1.msra.mxu0 0.0
    %1803 = vmatprep.subr.mxu0 0.0
    %1804 = vmatpush1.msra.mxu0 0.0
    %1805 = vmatprep.subr.mxu0 0.0
    %1806 = vmatpush1.msra.mxu0 0.0
    %1807 = vmatprep.subr.mxu0 0.0
    %1808 = vmatpush1.msra.mxu0 0.0
    %1809 = vmatprep.subr.mxu0 0.0
    %1810 = vmatpush1.msra.mxu0 0.0
    %1811 = vmatprep.subr.mxu0 0.0
    %1812 = vmatpush1.msra.mxu0 0.0
    %1813 = vmatprep.subr.mxu0 0.0
    %1814 = vmatpush1.msra.mxu0 0.0
    %1815 = vmatprep.mubr.f32.mxu0 0.0
    %v1816 = vand.u32 %v539, 4294901760
    %1817 = vmatmul.mubr.f32.gmra.mrb[0].mxu0 %v1816
    %v1818 = vpop.f32.mrb[0].mxu0
    %v1819 = vadd.f32 %v1732, %v1818
    %v1820 = vpop.f32.mrb[0].mxu0
    %1821 = vdwg.mxu0
    %v1822 = vsub.f32 %v17, %v1178
    %v1823 = vsub.f32 %v1822, %v63
    %1824 = vst.msk [vmem:[#allocation2] sm:$0xff] %vm45, %v1823
    %1825 = vadd.xlane.f32.xlu0 %v537
    %v1826 = vpop.xlane.xlu0 %1825
    %v1827 = vadd.f32 %v1826, %v64
    %v1828 = vmul.f32 %v68, %v1819
    %v1829 = vsel %vm45, %v1828, 0.0
    %1830 = vadd.xlane.f32.xlu0 %v1829
    %v1831 = vpop.xlane.xlu0 %1830
    %v1832 = vsub.f32 %v1827, %v1831
    %vm1833 = vcmask 7168
    %1834 = vst.msk [vmem:[#allocation4] sm:$0xff] %vm1833, %v1832
    // Predicated region
    $region14: #{_segmented_log_softmax.1} parent=1 // pred_check
      _
    $region15: #{_segmented_log_softmax.1} parent=1 // pred_check_branch
      %1836 = sbr.rel (0) target = $region17
    $region16: #{_segmented_log_softmax.1} parent=1 // pred_region
      %s1838 = ssub.s32 128, 32
      %1839 = vsyncadd [#allocation3], %s1838
      %s1840 = sshll.u32 [#allocation2], 4
      %s1841 = int_to_ptr.vmem [resolvable:$true] %s1840
      %1846 = dma.vmem_to_hbm [thread:$0]  %s1841, 32, %s3, [#allocation3], 32, 32, 2
    $region17: #{_segmented_log_softmax.1} parent=1 // pred_fallthru
      _
    // Predicated region
    $region18: #{_segmented_log_softmax.1} parent=1 // pred_check
      _
    $region19: #{_segmented_log_softmax.1} parent=1 // pred_check_branch
      %1848 = sbr.rel (0) target = $region21
    $region20: #{_segmented_log_softmax.1} parent=1 // pred_region
      // Predicated region
      $region22: #{_segmented_log_softmax.1} parent=20 // pred_check
        _
      $region23: #{_segmented_log_softmax.1} parent=20 // pred_check_branch
        %1850 = sbr.rel (0) target = $region25
      $region24: #{_segmented_log_softmax.1} parent=20 // pred_region
        // Predicated region
        $region26: #{_segmented_log_softmax.1} parent=24 // pred_check
          _
        $region27: #{_segmented_log_softmax.1} parent=24 // pred_check_branch
          %1852 = sbr.rel target = $region29
        $region28: #{_segmented_log_softmax.1} parent=24 // pred_region
          // Predicated region
          $region41: #{_segmented_log_softmax.1} parent=28 // pred_check
            _
          $region42: #{_segmented_log_softmax.1} parent=28 // pred_check_branch
            %1867 = sbr.rel (0) target = $region44
          $region43: #{_segmented_log_softmax.1} parent=28 // pred_region
            loop: start=0, step=1, limit=1
            $region45: #{_segmented_log_softmax.1} parent=43 // loop_pre_header
              _
            $region46: #{_segmented_log_softmax.1} parent=43 // loop_header
              %s1870 = sphi 0, %s1874
              %p1871 = scmp.ge.s32.totalorder %s1870, 1
              %s1875 = sphi [#allocation4], [#allocation4]
              %s1876 = sphi %s4, %s4
            $region47: #{_segmented_log_softmax.1} parent=43 // loop_header_branch
              %1873 = sbr.rel (%p1871) target = $region51
            $region48: #{_segmented_log_softmax.1} parent=43 // loop_body
              %v1877 = vld [vmem:[%s1875] sm:$0x3]
              %1878 = vst [vmem:[%s1876] sm:$0x3] %v1877
            $region49: #{_segmented_log_softmax.1} parent=43 // loop_footer
              %s1874 = sadd.s32 1, %s1870
            $region50: #{_segmented_log_softmax.1} parent=43 // loop_footer_branch
              %1869 = sbr.rel target = $region46
            $region51: #{_segmented_log_softmax.1} parent=43 // loop_exit
              _
          $region44: #{_segmented_log_softmax.1} parent=28 // pred_fallthru
            _
        $region29: #{_segmented_log_softmax.1} parent=24 // pred_fallthru
          _
        // Predicated region
        $region30: #{_segmented_log_softmax.1} parent=24 // pred_check
          _
        $region31: #{_segmented_log_softmax.1} parent=24 // pred_check_branch
          %1854 = sbr.rel (0) target = $region33
        $region32: #{_segmented_log_softmax.1} parent=24 // pred_region
          loop: start=0, step=1, limit=1
          $region34: #{_segmented_log_softmax.1} parent=32 // loop_pre_header
            _
          $region35: #{_segmented_log_softmax.1} parent=32 // loop_header
            %s1857 = sphi 0, %s1861
            %p1858 = scmp.ge.s32.totalorder %s1857, 1
            %s1862 = sphi [#allocation4], [#allocation4]
            %s1863 = sphi %s4, %s4
          $region36: #{_segmented_log_softmax.1} parent=32 // loop_header_branch
            %1860 = sbr.rel (%p1858) target = $region40
          $region37: #{_segmented_log_softmax.1} parent=32 // loop_body
            %v1864 = vld [vmem:[%s1862] sm:$0x3]
            %1865 = vst [vmem:[%s1863] sm:$0x3] %v1864
          $region38: #{_segmented_log_softmax.1} parent=32 // loop_footer
            %s1861 = sadd.s32 1, %s1857
          $region39: #{_segmented_log_softmax.1} parent=32 // loop_footer_branch
            %1856 = sbr.rel target = $region35
          $region40: #{_segmented_log_softmax.1} parent=32 // loop_exit
            _
        $region33: #{_segmented_log_softmax.1} parent=24 // pred_fallthru
          _
      $region25: #{_segmented_log_softmax.1} parent=20 // pred_fallthru
        _
      %1879 = vnop
    $region21: #{_segmented_log_softmax.1} parent=1 // pred_fallthru
      _
    // Predicated region
    $region52: #{_segmented_log_softmax.1} parent=1 // pred_check
      _
    $region53: #{_segmented_log_softmax.1} parent=1 // pred_check_branch
      %1881 = sbr.rel (0) target = $region55
    $region54: #{_segmented_log_softmax.1} parent=1 // pred_region
      %1882 = dma.done [#allocation3], 128
    $region55: #{_segmented_log_softmax.1} parent=1 // pred_fallthru
      _
    // Predicated region
    $region56: #{_segmented_log_softmax.1} parent=1 // pred_check
      _
    $region57: #{_segmented_log_softmax.1} parent=1 // pred_check_branch
      %1884 = sbr.rel (0) target = $region59
    $region58: #{_segmented_log_softmax.1} parent=1 // pred_region
      _
    $region59: #{_segmented_log_softmax.1} parent=1 // pred_fallthru
      _
    %1885 = vsyncpa [#allocation3], 1

</llo_original>
